<compile_context>
chip_gen: v6e
topology: v6e:2x2x1
jax: 0.10.0
libtpu: 0.0.40
codegen_flags: <defaults>
</compile_context>

<pallas_src>
import functools

import jax
import jax.numpy as jnp
from jax import lax
from jax.experimental import pallas as pl
from jax.experimental.pallas import tpu as pltpu


def _char_embedder_kernel(ids_ref, mask_ref, emb_ref, pos_ref, w_ref, b_ref,
                          tapv_ref, out_ref, pmask_ref, *, ds, pad):
    """One grid step = TB batch rows, stacked as (TB*L, .) in VMEM."""
    N = ids_ref.shape[0]                  # stacked rows = TB * L
    V = emb_ref.shape[0]
    D = w_ref.shape[1]
    K = tapv_ref.shape[0]
    Np = N // ds

    ids_col = ids_ref[...]                # (N, 1) int32
    mask_col = mask_ref[...]              # (N, 1) float32

    # --- nn.Embedding as one-hot @ table on the MXU (bf16 ops, f32 acc) -----
    onehot = (ids_col == lax.broadcasted_iota(jnp.int32, (N, V), 1)
              ).astype(jnp.bfloat16)                                     # (N, V)
    x = jnp.dot(onehot, emb_ref[...],
                preferred_element_type=jnp.float32)                      # (N, E)

    # Dropout(p=0.1) is identity at inference; add positions, mask characters.
    x = x + pos_ref[...].astype(jnp.float32)
    x = x * mask_col

    # --- Conv1d(E -> D, kernel=K, 'same') as a single stacked matmul --------
    # The K tap views are XLU sublane rolls of x; rows that would read across
    # a sequence boundary in the stacked layout are zeroed via tapv.
    taps = []
    for k in range(K):
        o = k - pad                       # y[t] += x[t + o] @ W[k]
        if o == 0:
            sh = x
        else:
            sh = pltpu.roll(x, shift=(-o) % N, axis=0) * tapv_ref[k]
        taps.append(sh.astype(jnp.bfloat16))
    xk = jnp.concatenate(taps, axis=-1)                                  # (N, K*E)
    h = jnp.dot(xk, w_ref[...], preferred_element_type=jnp.float32)      # (N, D)
    h = jax.nn.gelu(h + b_ref[...], approximate=True)

    # --- masked max-pool over non-overlapping windows of ds (reshape pool) --
    hm = jnp.where(mask_col > 0.5, h, jnp.float32(-1e9))                 # (N, D)
    pooled = jnp.max(hm.reshape(Np, ds, D), axis=1)                      # (Np, D)
    pm = jnp.max(mask_col.reshape(Np, ds, 1), axis=1)                    # (Np, 1)

    out_ref[...] = pooled * pm            # zero fully-masked windows
    pmask_ref[...] = pm                   # NOTE: lane-width-1; fine at this size


def _pick_block_b(B, L, target_rows=128):
    """Largest divisor of B with TB*L <= max(target_rows, L), keeping at least
    two grid steps when B allows (v7x has 2 TensorCores)."""
    best = 1
    for tb in range(1, B + 1):
        if B % tb:
            continue
        if tb * L > max(target_rows, L):
            continue
        if B // tb < 2 and B > 1 and tb != 1:
            continue
        best = tb
    return best


def char_embedder_forward(ids, mask, params, *, ds_factor, block_b=None):
    """ids: (B, L) int32, mask: (B, L) or None.  Returns ((B, L/ds, D), (B, L/ds))."""
    B, L = ids.shape
    emb = params["emb"].astype(jnp.bfloat16)                 # (V, E)
    pos = params["pos"][0, :L].astype(jnp.bfloat16)          # (L, E)
    w = params["conv_w"]                                      # (K, E, D)
    b = params["conv_b"].reshape(1, -1).astype(jnp.float32)   # (1, D)
    V, E = emb.shape
    K, _, D = w.shape
    pad = (K - 1) // 2
    assert L % ds_factor == 0
    Lp = L // ds_factor

    TB = _pick_block_b(B, L) if block_b is None else block_b
    assert B % TB == 0
    N, Np = TB * L, TB * Lp
    assert TB == B or (N % 8 == 0 and Np % 8 == 0), "blocks must be sublane-aligned"

    if mask is None:
        mask = jnp.ones((B, L), jnp.float32)
    mask = mask.astype(jnp.float32)

    # Stacked (row-major) layouts fed to the kernel.
    ids_col = ids.astype(jnp.int32).reshape(B * L, 1)          # (B*L, 1)
    mask_col = mask.reshape(B * L, 1)                          # (B*L, 1)
    pos_t = jnp.tile(pos, (TB, 1))                             # (TB*L, E) bf16
    w_st = w.reshape(K * E, D).astype(jnp.bfloat16)            # (K*E, D)  stacked taps

    # Per-tap boundary validity in the stacked layout: tap offset o is valid at
    # stacked row t iff 0 <= (t mod L) + o < L.  Identical for every grid step.
    pos_in_seq = jnp.arange(N) % L
    offs = jnp.arange(K) - pad
    tap_valid = ((pos_in_seq[None, :] + offs[:, None] >= 0)
                 & (pos_in_seq[None, :] + offs[:, None] < L)
                 ).astype(jnp.float32)[:, :, None]             # (K, TB*L, 1)

    kernel = functools.partial(_char_embedder_kernel, ds=ds_factor, pad=pad)

    out, pmask = pl.pallas_call(
        kernel,
        out_shape=(
            jax.ShapeDtypeStruct((B * Lp, D), jnp.float32),
            jax.ShapeDtypeStruct((B * Lp, 1), jnp.float32),
        ),
        grid=(B // TB,),
        in_specs=[
            pl.BlockSpec((N, 1), lambda g: (g, 0)),            # ids (stacked col)
            pl.BlockSpec((N, 1), lambda g: (g, 0)),            # mask (stacked col)
            pl.BlockSpec((V, E), lambda g: (0, 0)),            # embedding table
            pl.BlockSpec((N, E), lambda g: (0, 0)),            # tiled positional emb
            pl.BlockSpec((K * E, D), lambda g: (0, 0)),        # stacked conv weight
            pl.BlockSpec((1, D), lambda g: (0, 0)),            # conv bias
            pl.BlockSpec((K, N, 1), lambda g: (0, 0, 0)),      # tap boundary validity
        ],
        out_specs=(
            pl.BlockSpec((Np, D), lambda g: (g, 0)),
            pl.BlockSpec((Np, 1), lambda g: (g, 0)),
        ),
        compiler_params=pltpu.CompilerParams(
            dimension_semantics=("parallel",),
            vmem_limit_bytes=32 * 1024 * 1024,                 # safe on v5e/v6e/v7x
        ),
    )(ids_col, mask_col, emb, pos_t, w_st, b, tap_valid)

    return out.reshape(B, Lp, D), pmask.reshape(B, Lp)


def init_params(key, vocab_size, char_emb_dim, dim, kernel_size=3):
    k1, k2, k3, k4 = jax.random.split(key, 4)
    emb = jax.random.normal(k1, (vocab_size, char_emb_dim), jnp.float32)
    pos = jax.random.normal(k2, (1, 1024, char_emb_dim), jnp.float32)
    fan_in = char_emb_dim * kernel_size
    conv_w = jax.random.normal(
        k3, (kernel_size, char_emb_dim, dim), jnp.float32) / jnp.sqrt(fan_in)
    conv_b = 0.01 * jax.random.normal(k4, (dim,), jnp.float32)
    return {"emb": emb, "pos": pos, "conv_w": conv_w, "conv_b": conv_b}


def reference_forward(ids, mask, params, *, ds_factor):
    """Pure-JAX reference mirroring the kernel's mixed precision
    (bf16 matmul operands, f32 accumulation)."""
    emb = params["emb"].astype(jnp.bfloat16).astype(jnp.float32)
    pos = params["pos"].astype(jnp.bfloat16).astype(jnp.float32)
    w = params["conv_w"].astype(jnp.bfloat16).astype(jnp.float32)
    b = params["conv_b"].astype(jnp.float32)
    B, L = ids.shape
    K = params["conv_w"].shape[0]
    pad = (K - 1) // 2
    if mask is None:
        mask = jnp.ones((B, L), jnp.float32)
    mask = mask.astype(jnp.float32)

    x = emb[ids] + pos[:, :L]
    x = x * mask[..., None]
    x = x.astype(jnp.bfloat16).astype(jnp.float32)   # conv input is bf16 in the kernel
    xp = jnp.pad(x, ((0, 0), (pad, pad), (0, 0)))
    h = jnp.zeros((B, L, w.shape[2]), jnp.float32)
    for k in range(K):
        h = h + jnp.einsum("ble,ed->bld", xp[:, k:k + L], w[k])
    h = jax.nn.gelu(h + b, approximate=True)

    hm = jnp.where(mask[..., None] > 0.5, h, -1e9)
    pooled = hm.reshape(B, L // ds_factor, ds_factor, -1).max(axis=2)
    pmask = mask.reshape(B, L // ds_factor, ds_factor).max(axis=2)
    return pooled * pmask[..., None], pmask


if __name__ == "__main__":
    vocab_size, char_emb_dim, dim, ds_factor = 128, 32, 64, 4
    B, L = 8, 32

    key = jax.random.PRNGKey(0)
    kp, ki = jax.random.split(key)
    params = init_params(kp, vocab_size, char_emb_dim, dim)

    ids = jax.random.randint(ki, (B, L), 0, vocab_size, dtype=jnp.int32)
    mask = jnp.ones((B, L), jnp.float32)
    mask = mask.at[1, 24:].set(0.0)   # pad tail of row 1
    mask = mask.at[5, 10:].set(0.0)   # pad most of row 5 (partial + empty windows)

    out, pmask = char_embedder_forward(ids, mask, params, ds_factor=ds_factor)
    jax.block_until_ready((out, pmask))

    ref_out, ref_pmask = reference_forward(ids, mask, params, ds_factor=ds_factor)
    assert out.shape == (B, L // ds_factor, dim)
    assert pmask.shape == (B, L // ds_factor)
    assert jnp.allclose(pmask, ref_pmask)
    assert jnp.allclose(out, ref_out, atol=2e-3, rtol=2e-3), \
        float(jnp.max(jnp.abs(out - ref_out)))

    print("KERNEL_OK")
</pallas_src>

<mosaic_0001>
module attributes {stable_mosaic.version = 11 : i64} {
  func.func @_char_embedder_kernel(%arg0: i32, %arg1: memref<128x1xi32, #tpu.memory_space<vmem>>, %arg2: memref<128x1xf32, #tpu.memory_space<vmem>>, %arg3: memref<128x32xbf16, #tpu.memory_space<vmem>>, %arg4: memref<128x32xbf16, #tpu.memory_space<vmem>>, %arg5: memref<96x64xbf16, #tpu.memory_space<vmem>>, %arg6: memref<1x64xf32, #tpu.memory_space<vmem>>, %arg7: memref<3x128x1xf32, #tpu.memory_space<vmem>>, %arg8: memref<32x64xf32, #tpu.memory_space<vmem>>, %arg9: memref<32x1xf32, #tpu.memory_space<vmem>>) attributes {dimension_semantics = [#tpu.dimension_semantics<parallel>], iteration_bounds = array<i64: 2>, scalar_prefetch = 0 : i64, scratch_operands = 0 : i64, tpu.core_type = #tpu.core_type<tc>, window_params = [{transform_indices = @transform_0, window_bounds = array<i64: 128, 1>}, {transform_indices = @transform_1, window_bounds = array<i64: 128, 1>}, {pipeline_mode = #tpu.pipeline_mode<synchronous>, transform_indices = @transform_2, window_bounds = array<i64: 128, 32>}, {pipeline_mode = #tpu.pipeline_mode<synchronous>, transform_indices = @transform_3, window_bounds = array<i64: 128, 32>}, {pipeline_mode = #tpu.pipeline_mode<synchronous>, transform_indices = @transform_4, window_bounds = array<i64: 96, 64>}, {pipeline_mode = #tpu.pipeline_mode<synchronous>, transform_indices = @transform_5, window_bounds = array<i64: 1, 64>}, {pipeline_mode = #tpu.pipeline_mode<synchronous>, transform_indices = @transform_6, window_bounds = array<i64: 3, 128, 1>}, {transform_indices = @transform_7, window_bounds = array<i64: 32, 64>}, {transform_indices = @transform_8, window_bounds = array<i64: 32, 1>}]} {
    %c0 = arith.constant 0 : index
    %c0_0 = arith.constant 0 : index
    %0 = vector.load %arg1[%c0, %c0_0] : memref<128x1xi32, #tpu.memory_space<vmem>>, vector<128x1xi32>
    %c0_1 = arith.constant 0 : index
    %c0_2 = arith.constant 0 : index
    %1 = vector.load %arg2[%c0_1, %c0_2] : memref<128x1xf32, #tpu.memory_space<vmem>>, vector<128x1xf32>
    %2 = tpu.iota {dimensions = array<i32: 1>} : vector<128x128xi32>
    %3 = vector.broadcast %0 : vector<128x1xi32> to vector<128x128xi32>
    %4 = arith.cmpi eq, %3, %2 : vector<128x128xi32>
    %5 = arith.extui %4 : vector<128x128xi1> to vector<128x128xi32>
    %6 = arith.sitofp %5 : vector<128x128xi32> to vector<128x128xf32>
    %7 = arith.truncf %6 : vector<128x128xf32> to vector<128x128xbf16>
    %c0_3 = arith.constant 0 : index
    %c0_4 = arith.constant 0 : index
    %8 = vector.load %arg3[%c0_3, %c0_4] : memref<128x32xbf16, #tpu.memory_space<vmem>>, vector<128x32xbf16>
    %cst = arith.constant dense<0.000000e+00> : vector<128x32xf32>
    %9 = tpu.matmul %7, %8, %cst {dimension_numbers = #tpu.dot_dimension_numbers<[1], [0], [0], [1], [0, 0, 1, 1], [], []>} : vector<128x128xbf16>, vector<128x32xbf16>, vector<128x32xf32> -> vector<128x32xf32>
    %c0_5 = arith.constant 0 : index
    %c0_6 = arith.constant 0 : index
    %10 = vector.load %arg4[%c0_5, %c0_6] : memref<128x32xbf16, #tpu.memory_space<vmem>>, vector<128x32xbf16>
    %11 = arith.extf %10 : vector<128x32xbf16> to vector<128x32xf32>
    %12 = arith.addf %9, %11 : vector<128x32xf32>
    %13 = vector.broadcast %1 : vector<128x1xf32> to vector<128x32xf32>
    %14 = arith.mulf %12, %13 : vector<128x32xf32>
    %c1_i32 = arith.constant 1 : i32
    %15 = tpu.dynamic_rotate %14 by %c1_i32 dim 0 : vector<128x32xf32>, i32 -> vector<128x32xf32>
    %c0_7 = arith.constant 0 : index
    %c0_8 = arith.constant 0 : index
    %c0_9 = arith.constant 0 : index
    %16 = vector.load %arg7[%c0_7, %c0_8, %c0_9] : memref<3x128x1xf32, #tpu.memory_space<vmem>>, vector<1x128x1xf32>
    %17 = vector.shape_cast %16 : vector<1x128x1xf32> to vector<128x1xf32>
    %18 = vector.broadcast %17 : vector<128x1xf32> to vector<128x32xf32>
    %19 = arith.mulf %15, %18 : vector<128x32xf32>
    %20 = arith.truncf %19 : vector<128x32xf32> to vector<128x32xbf16>
    %21 = arith.truncf %14 : vector<128x32xf32> to vector<128x32xbf16>
    %c127_i32 = arith.constant 127 : i32
    %22 = tpu.dynamic_rotate %14 by %c127_i32 dim 0 : vector<128x32xf32>, i32 -> vector<128x32xf32>
    %c2 = arith.constant 2 : index
    %c0_10 = arith.constant 0 : index
    %c0_11 = arith.constant 0 : index
    %23 = vector.load %arg7[%c2, %c0_10, %c0_11] : memref<3x128x1xf32, #tpu.memory_space<vmem>>, vector<1x128x1xf32>
    %24 = vector.shape_cast %23 : vector<1x128x1xf32> to vector<128x1xf32>
    %25 = vector.broadcast %24 : vector<128x1xf32> to vector<128x32xf32>
    %26 = arith.mulf %22, %25 : vector<128x32xf32>
    %27 = arith.truncf %26 : vector<128x32xf32> to vector<128x32xbf16>
    %28 = tpu.concatenate %20, %21, %27 in 1 : vector<128x32xbf16>, vector<128x32xbf16>, vector<128x32xbf16> -> vector<128x96xbf16>
    %c0_12 = arith.constant 0 : index
    %c0_13 = arith.constant 0 : index
    %29 = vector.load %arg5[%c0_12, %c0_13] : memref<96x64xbf16, #tpu.memory_space<vmem>>, vector<96x64xbf16>
    %cst_14 = arith.constant dense<0.000000e+00> : vector<128x64xf32>
    %30 = tpu.matmul %28, %29, %cst_14 {dimension_numbers = #tpu.dot_dimension_numbers<[1], [0], [0], [1], [0, 0, 1, 1], [], []>} : vector<128x96xbf16>, vector<96x64xbf16>, vector<128x64xf32> -> vector<128x64xf32>
    %c0_15 = arith.constant 0 : index
    %c0_16 = arith.constant 0 : index
    %31 = vector.load %arg6[%c0_15, %c0_16] : memref<1x64xf32, #tpu.memory_space<vmem>>, vector<1x64xf32>
    %32 = vector.broadcast %31 : vector<1x64xf32> to vector<128x64xf32>
    %33 = arith.addf %30, %32 : vector<128x64xf32>
    %34 = arith.mulf %33, %33 : vector<128x64xf32>
    %35 = arith.mulf %33, %34 : vector<128x64xf32>
    %cst_17 = arith.constant 4.471500e-02 : f32
    %36 = vector.broadcast %cst_17 : f32 to vector<128x64xf32>
    %37 = arith.mulf %36, %35 : vector<128x64xf32>
    %38 = arith.addf %33, %37 : vector<128x64xf32>
    %cst_18 = arith.constant 0.797884583 : f32
    %39 = vector.broadcast %cst_18 : f32 to vector<128x64xf32>
    %40 = arith.mulf %39, %38 : vector<128x64xf32>
    %41 = math.tanh %40 : vector<128x64xf32>
    %cst_19 = arith.constant 1.000000e+00 : f32
    %42 = vector.broadcast %cst_19 : f32 to vector<128x64xf32>
    %43 = arith.addf %42, %41 : vector<128x64xf32>
    %cst_20 = arith.constant 5.000000e-01 : f32
    %44 = vector.broadcast %cst_20 : f32 to vector<128x64xf32>
    %45 = arith.mulf %44, %43 : vector<128x64xf32>
    %46 = arith.mulf %33, %45 : vector<128x64xf32>
    %cst_21 = arith.constant 5.000000e-01 : f32
    %47 = vector.broadcast %cst_21 : f32 to vector<128x1xf32>
    %48 = arith.cmpf ogt, %1, %47 : vector<128x1xf32>
    %cst_22 = arith.constant -1.000000e+09 : f32
    %49 = vector.shape_cast %48 : vector<128x1xi1> to vector<128x1xi1>
    %50 = vector.broadcast %49 : vector<128x1xi1> to vector<128x64xi1>
    %51 = vector.broadcast %cst_22 : f32 to vector<128x64xf32>
    %52 = arith.select %50, %46, %51 : vector<128x64xi1>, vector<128x64xf32>
    %53 = vector.shape_cast %52 : vector<128x64xf32> to vector<32x4x64xf32>
    %cst_23 = arith.constant dense<0xFF800000> : vector<32x64xf32>
    %54 = vector.multi_reduction <maximumf>, %53, %cst_23 [1] : vector<32x4x64xf32> to vector<32x64xf32>
    %55 = vector.shape_cast %1 : vector<128x1xf32> to vector<32x4x1xf32>
    %cst_24 = arith.constant dense<0xFF800000> : vector<32x1xf32>
    %56 = vector.multi_reduction <maximumf>, %55, %cst_24 [1] : vector<32x4x1xf32> to vector<32x1xf32>
    %57 = vector.broadcast %56 : vector<32x1xf32> to vector<32x64xf32>
    %58 = arith.mulf %54, %57 : vector<32x64xf32>
    %c0_25 = arith.constant 0 : index
    %c0_26 = arith.constant 0 : index
    %59 = vector.load %arg8[%c0_25, %c0_26] : memref<32x64xf32, #tpu.memory_space<vmem>>, vector<32x64xf32>
    tpu.vector_store %arg8[%c0_25, %c0_26], %58 {strides = array<i32>} : memref<32x64xf32, #tpu.memory_space<vmem>>, vector<32x64xf32>,
    %c0_27 = arith.constant 0 : index
    %c0_28 = arith.constant 0 : index
    %60 = vector.load %arg9[%c0_27, %c0_28] : memref<32x1xf32, #tpu.memory_space<vmem>>, vector<32x1xf32>
    tpu.vector_store %arg9[%c0_27, %c0_28], %56 {strides = array<i32>} : memref<32x1xf32, #tpu.memory_space<vmem>>, vector<32x1xf32>,
    return
  }
  func.func @transform_0(%arg0: i32) -> (i32, i32) {
    %c0_i32 = arith.constant 0 : i32
    %c0_i32_0 = arith.constant 0 : i32
    return %arg0, %c0_i32 : i32, i32
  }
  func.func @transform_1(%arg0: i32) -> (i32, i32) {
    %c0_i32 = arith.constant 0 : i32
    %c0_i32_0 = arith.constant 0 : i32
    return %arg0, %c0_i32 : i32, i32
  }
  func.func @transform_2(%arg0: i32) -> (i32, i32) {
    %c0_i32 = arith.constant 0 : i32
    %c0_i32_0 = arith.constant 0 : i32
    %c0_i32_1 = arith.constant 0 : i32
    return %c0_i32, %c0_i32_0 : i32, i32
  }
  func.func @transform_3(%arg0: i32) -> (i32, i32) {
    %c0_i32 = arith.constant 0 : i32
    %c0_i32_0 = arith.constant 0 : i32
    %c0_i32_1 = arith.constant 0 : i32
    return %c0_i32, %c0_i32_0 : i32, i32
  }
  func.func @transform_4(%arg0: i32) -> (i32, i32) {
    %c0_i32 = arith.constant 0 : i32
    %c0_i32_0 = arith.constant 0 : i32
    %c0_i32_1 = arith.constant 0 : i32
    return %c0_i32, %c0_i32_0 : i32, i32
  }
  func.func @transform_5(%arg0: i32) -> (i32, i32) {
    %c0_i32 = arith.constant 0 : i32
    %c0_i32_0 = arith.constant 0 : i32
    %c0_i32_1 = arith.constant 0 : i32
    return %c0_i32, %c0_i32_0 : i32, i32
  }
  func.func @transform_6(%arg0: i32) -> (i32, i32, i32) {
    %c0_i32 = arith.constant 0 : i32
    %c0_i32_0 = arith.constant 0 : i32
    %c0_i32_1 = arith.constant 0 : i32
    %c0_i32_2 = arith.constant 0 : i32
    return %c0_i32, %c0_i32_0, %c0_i32_1 : i32, i32, i32
  }
  func.func @transform_7(%arg0: i32) -> (i32, i32) {
    %c0_i32 = arith.constant 0 : i32
    %c0_i32_0 = arith.constant 0 : i32
    return %arg0, %c0_i32 : i32, i32
  }
  func.func @transform_8(%arg0: i32) -> (i32, i32) {
    %c0_i32 = arith.constant 0 : i32
    %c0_i32_0 = arith.constant 0 : i32
    return %arg0, %c0_i32 : i32, i32
  }
}

</mosaic_0001>

<llo_original>
// kernel: tpu_custom_call.1
$region0: #{tpu_custom_call.1}
  #allocation0 [shape = 'u32[]', space=smem, size = 0x4, offset = 0x4, fixed_abs, tag = 'smem constant byte address 0x4 - core index']
  #allocation1 [shape = 'u32[144,128]{1,0:T(1,128)}', space=vmem, size = 0x12000, scoped, tag = 'internal scratch']
  %s0 = inlined_call_operand.vmem [shape: s32[256,1], index: 0, kind: input, shape index: {}]
  %s1 = inlined_call_operand.vmem [shape: f32[256,1], index: 1, kind: input, shape index: {}]
  %s2 = inlined_call_operand.vmem [shape: bf16[128,32], index: 2, kind: input, shape index: {}]
  %s3 = inlined_call_operand.vmem [shape: bf16[128,32], index: 3, kind: input, shape index: {}]
  %s4 = inlined_call_operand.vmem [shape: bf16[96,64], index: 4, kind: input, shape index: {}]
  %s5 = inlined_call_operand.vmem [shape: f32[1,64], index: 5, kind: input, shape index: {}]
  %s6 = inlined_call_operand.vmem [shape: f32[3,128,1], index: 6, kind: input, shape index: {}]
  %s7 = inlined_call_operand.hbm [shape: f32[64,64], index: 7, kind: output, shape index: {0}]
  %s8 = inlined_call_operand.vmem [shape: f32[64,1], index: 8, kind: output, shape index: {1}]
  %9 = xla_tuple %s7, %s8
  %s10 = sld [smem:[#allocation0]]
  $region69: #{tpu_custom_call.1} parent=0
    _
  %s12 = ssub.s32 1, %s10
  %s13 = scalar_select 0, %s12, %s10
  $region1: #{tpu_custom_call.1} parent=0
    #allocation2 [shape = 'u8[32768]{0}', space=vmem, size = 0x8000, scoped, tag = 'output window, operand 0']
    #allocation3 [shape = 's32[2]{0}', space=sflag, size = 0x8, scoped, tag = 'scoped memory for tpu_custom_call.1']
    %14 = vsyncpa [#allocation3], 0
    %s15 = scalar_lea.sflag [#allocation3], 1
    %16 = vsyncpa %s15, 0
    loop: start=0, step=1, limit=4
    $region2: #{tpu_custom_call.1} parent=1 // loop_pre_header
      _
    $region3: #{tpu_custom_call.1} parent=1 // loop_header
      %s18 = sphi 0, %s22
      %p19 = scmp.ge.s32.totalorder %s18, 4
      %s28 = sphi 0, %s30
      %s31 = sphi 0, %s28
      %s32 = sphi 0, %s31
      %s48 = sphi 0, %s32
      %s54 = sphi 0, %s56
      %s57 = sphi 0, %s54
      %s58 = sphi 0, %s57
      %s74 = sphi 0, %s58
      %s78 = sphi 0, %s78
      %s80 = sphi 0, %s78
      %s81 = sphi 0, %s80
      %s95 = sphi 0, %s81
      %s99 = sphi 0, %s99
      %s101 = sphi 0, %s99
      %s102 = sphi 0, %s101
      %s116 = sphi 0, %s102
      %s120 = sphi 0, %s120
      %s122 = sphi 0, %s120
      %s123 = sphi 0, %s122
      %s137 = sphi 0, %s123
      %s141 = sphi 0, %s141
      %s143 = sphi 0, %s141
      %s144 = sphi 0, %s143
      %s158 = sphi 0, %s144
      %s162 = sphi 0, %s162
      %s164 = sphi 0, %s162
      %s165 = sphi 0, %s164
      %s179 = sphi 0, %s165
      %s185 = sphi 0, %s187
      %s188 = sphi 0, %s185
      %s189 = sphi 0, %s188
      %s205 = sphi 0, %s189
      %s211 = sphi 0, %s213
      %s214 = sphi 0, %s211
      %s215 = sphi 0, %s214
      %s231 = sphi 0, %s215
    $region4: #{tpu_custom_call.1} parent=1 // loop_header_branch
      %21 = sbr.rel (%p19) target = $region8
    $region5: #{tpu_custom_call.1} parent=1 // loop_body
      %s23 = ssub.s32 %s18, 1
      %s24 = ssub.s32 %s18, 2
      %s25 = sadd.s32 %s18, 1
      %s26 = ssub.s32 %s18, %s25
      %p27 = scmp.eq.s32.totalorder %s26, 0
      %s29 = sadd.s32 %s28, 1
      %s30 = scalar_select %p27, %s28, %s29
      %p33 = pneg %p27
      %p34 = scmp.eq.s32.totalorder %s18, 1
      %p35 = por %p33, %p34
      %p36 = scmp.ne.s32.totalorder %s28, %s31
      %p37 = scmp.eq.s32.totalorder %s18, 0
      %p38 = por %p36, %p37
      %p39 = scmp.ne.s32.totalorder %s28, %s31
      %p40 = scmp.eq.s32.totalorder %s23, 1
      %p41 = por %p39, %p40
      %p42 = scmp.ne.s32.totalorder %s31, %s32
      %p43 = scmp.eq.s32.totalorder %s23, 0
      %p44 = por %p42, %p43
      %p45 = scmp.ne.s32.totalorder %s31, %s32
      %p46 = scmp.eq.s32.totalorder %s24, 1
      %p47 = por %p45, %p46
      %p49 = scmp.ne.s32.totalorder %s32, %s48
      %p50 = scmp.eq.s32.totalorder %s24, 0
      %p51 = por %p49, %p50
      %s52 = ssub.s32 %s18, %s25
      %p53 = scmp.eq.s32.totalorder %s52, 0
      %s55 = sadd.s32 %s54, 1
      %s56 = scalar_select %p53, %s54, %s55
      %p59 = pneg %p53
      %p60 = scmp.eq.s32.totalorder %s18, 1
      %p61 = por %p59, %p60
      %p62 = scmp.ne.s32.totalorder %s54, %s57
      %p63 = scmp.eq.s32.totalorder %s18, 0
      %p64 = por %p62, %p63
      %p65 = scmp.ne.s32.totalorder %s54, %s57
      %p66 = scmp.eq.s32.totalorder %s23, 1
      %p67 = por %p65, %p66
      %p68 = scmp.ne.s32.totalorder %s57, %s58
      %p69 = scmp.eq.s32.totalorder %s23, 0
      %p70 = por %p68, %p69
      %p71 = scmp.ne.s32.totalorder %s57, %s58
      %p72 = scmp.eq.s32.totalorder %s24, 1
      %p73 = por %p71, %p72
      %p75 = scmp.ne.s32.totalorder %s58, %s74
      %p76 = scmp.eq.s32.totalorder %s24, 0
      %p77 = por %p75, %p76
      %s79 = sadd.s32 %s78, 1
      %p82 = scmp.eq.s32.totalorder %s18, 1
      %p83 = scmp.ne.s32.totalorder %s78, %s80
      %p84 = scmp.eq.s32.totalorder %s18, 0
      %p85 = por %p83, %p84
      %p86 = scmp.ne.s32.totalorder %s78, %s80
      %p87 = scmp.eq.s32.totalorder %s23, 1
      %p88 = por %p86, %p87
      %p89 = scmp.ne.s32.totalorder %s80, %s81
      %p90 = scmp.eq.s32.totalorder %s23, 0
      %p91 = por %p89, %p90
      %p92 = scmp.ne.s32.totalorder %s80, %s81
      %p93 = scmp.eq.s32.totalorder %s24, 1
      %p94 = por %p92, %p93
      %p96 = scmp.ne.s32.totalorder %s81, %s95
      %p97 = scmp.eq.s32.totalorder %s24, 0
      %p98 = por %p96, %p97
      %s100 = sadd.s32 %s99, 1
      %p103 = scmp.eq.s32.totalorder %s18, 1
      %p104 = scmp.ne.s32.totalorder %s99, %s101
      %p105 = scmp.eq.s32.totalorder %s18, 0
      %p106 = por %p104, %p105
      %p107 = scmp.ne.s32.totalorder %s99, %s101
      %p108 = scmp.eq.s32.totalorder %s23, 1
      %p109 = por %p107, %p108
      %p110 = scmp.ne.s32.totalorder %s101, %s102
      %p111 = scmp.eq.s32.totalorder %s23, 0
      %p112 = por %p110, %p111
      %p113 = scmp.ne.s32.totalorder %s101, %s102
      %p114 = scmp.eq.s32.totalorder %s24, 1
      %p115 = por %p113, %p114
      %p117 = scmp.ne.s32.totalorder %s102, %s116
      %p118 = scmp.eq.s32.totalorder %s24, 0
      %p119 = por %p117, %p118
      %s121 = sadd.s32 %s120, 1
      %p124 = scmp.eq.s32.totalorder %s18, 1
      %p125 = scmp.ne.s32.totalorder %s120, %s122
      %p126 = scmp.eq.s32.totalorder %s18, 0
      %p127 = por %p125, %p126
      %p128 = scmp.ne.s32.totalorder %s120, %s122
      %p129 = scmp.eq.s32.totalorder %s23, 1
      %p130 = por %p128, %p129
      %p131 = scmp.ne.s32.totalorder %s122, %s123
      %p132 = scmp.eq.s32.totalorder %s23, 0
      %p133 = por %p131, %p132
      %p134 = scmp.ne.s32.totalorder %s122, %s123
      %p135 = scmp.eq.s32.totalorder %s24, 1
      %p136 = por %p134, %p135
      %p138 = scmp.ne.s32.totalorder %s123, %s137
      %p139 = scmp.eq.s32.totalorder %s24, 0
      %p140 = por %p138, %p139
      %s142 = sadd.s32 %s141, 1
      %p145 = scmp.eq.s32.totalorder %s18, 1
      %p146 = scmp.ne.s32.totalorder %s141, %s143
      %p147 = scmp.eq.s32.totalorder %s18, 0
      %p148 = por %p146, %p147
      %p149 = scmp.ne.s32.totalorder %s141, %s143
      %p150 = scmp.eq.s32.totalorder %s23, 1
      %p151 = por %p149, %p150
      %p152 = scmp.ne.s32.totalorder %s143, %s144
      %p153 = scmp.eq.s32.totalorder %s23, 0
      %p154 = por %p152, %p153
      %p155 = scmp.ne.s32.totalorder %s143, %s144
      %p156 = scmp.eq.s32.totalorder %s24, 1
      %p157 = por %p155, %p156
      %p159 = scmp.ne.s32.totalorder %s144, %s158
      %p160 = scmp.eq.s32.totalorder %s24, 0
      %p161 = por %p159, %p160
      %s163 = sadd.s32 %s162, 1
      %p166 = scmp.eq.s32.totalorder %s18, 1
      %p167 = scmp.ne.s32.totalorder %s162, %s164
      %p168 = scmp.eq.s32.totalorder %s18, 0
      %p169 = por %p167, %p168
      %p170 = scmp.ne.s32.totalorder %s162, %s164
      %p171 = scmp.eq.s32.totalorder %s23, 1
      %p172 = por %p170, %p171
      %p173 = scmp.ne.s32.totalorder %s164, %s165
      %p174 = scmp.eq.s32.totalorder %s23, 0
      %p175 = por %p173, %p174
      %p176 = scmp.ne.s32.totalorder %s164, %s165
      %p177 = scmp.eq.s32.totalorder %s24, 1
      %p178 = por %p176, %p177
      %p180 = scmp.ne.s32.totalorder %s165, %s179
      %p181 = scmp.eq.s32.totalorder %s24, 0
      %p182 = por %p180, %p181
      %s183 = ssub.s32 %s18, %s25
      %p184 = scmp.eq.s32.totalorder %s183, 0
      %s186 = sadd.s32 %s185, 1
      %s187 = scalar_select %p184, %s185, %s186
      %p190 = pneg %p184
      %p191 = scmp.eq.s32.totalorder %s18, 1
      %p192 = por %p190, %p191
      %p193 = scmp.ne.s32.totalorder %s185, %s188
      %p194 = scmp.eq.s32.totalorder %s18, 0
      %p195 = por %p193, %p194
      %p196 = scmp.ne.s32.totalorder %s185, %s188
      %p197 = scmp.eq.s32.totalorder %s23, 1
      %p198 = por %p196, %p197
      %p199 = scmp.ne.s32.totalorder %s188, %s189
      %p200 = scmp.eq.s32.totalorder %s23, 0
      %p201 = por %p199, %p200
      %p202 = scmp.ne.s32.totalorder %s188, %s189
      %p203 = scmp.eq.s32.totalorder %s24, 1
      %p204 = por %p202, %p203
      %p206 = scmp.ne.s32.totalorder %s189, %s205
      %p207 = scmp.eq.s32.totalorder %s24, 0
      %p208 = por %p206, %p207
      %s209 = ssub.s32 %s18, %s25
      %p210 = scmp.eq.s32.totalorder %s209, 0
      %s212 = sadd.s32 %s211, 1
      %s213 = scalar_select %p210, %s211, %s212
      %p216 = pneg %p210
      %p217 = scmp.eq.s32.totalorder %s18, 1
      %p218 = por %p216, %p217
      %p219 = scmp.ne.s32.totalorder %s211, %s214
      %p220 = scmp.eq.s32.totalorder %s18, 0
      %p221 = por %p219, %p220
      %p222 = scmp.ne.s32.totalorder %s211, %s214
      %p223 = scmp.eq.s32.totalorder %s23, 1
      %p224 = por %p222, %p223
      %p225 = scmp.ne.s32.totalorder %s214, %s215
      %p226 = scmp.eq.s32.totalorder %s23, 0
      %p227 = por %p225, %p226
      %p228 = scmp.ne.s32.totalorder %s214, %s215
      %p229 = scmp.eq.s32.totalorder %s24, 1
      %p230 = por %p228, %p229
      %p232 = scmp.ne.s32.totalorder %s215, %s231
      %p233 = scmp.eq.s32.totalorder %s24, 0
      %p234 = por %p232, %p233
      %p235 = scmp.le.s32.totalorder 1, %s18
      %p236 = scmp.lt.s32.totalorder %s18, 3
      %p237 = pnand %p235, %p236
      %p238 = pneg %p237
      // Predicated region
      $region9: #{tpu_custom_call.1} parent=5 // pred_check
        _
      $region10: #{tpu_custom_call.1} parent=5 // pred_check_branch
        %240 = sbr.rel (%p237) target = $region12
      $region11: #{tpu_custom_call.1} parent=5 // pred_region
        %s241 = ssub.s32 %s18, 1
        // Predicated region
        $region13: #{tpu_custom_call.1} parent=11 // pred_check
          %p242 = pneg %p91
        $region14: #{tpu_custom_call.1} parent=11 // pred_check_branch
          %244 = sbr.rel (%p242) target = $region16
        $region15: #{tpu_custom_call.1} parent=11 // pred_region
          _
        $region16: #{tpu_custom_call.1} parent=11 // pred_fallthru
          _
        // Predicated region
        $region17: #{tpu_custom_call.1} parent=11 // pred_check
          %p245 = pneg %p112
        $region18: #{tpu_custom_call.1} parent=11 // pred_check_branch
          %247 = sbr.rel (%p245) target = $region20
        $region19: #{tpu_custom_call.1} parent=11 // pred_region
          _
        $region20: #{tpu_custom_call.1} parent=11 // pred_fallthru
          _
        // Predicated region
        $region21: #{tpu_custom_call.1} parent=11 // pred_check
          %p248 = pneg %p133
        $region22: #{tpu_custom_call.1} parent=11 // pred_check_branch
          %250 = sbr.rel (%p248) target = $region24
        $region23: #{tpu_custom_call.1} parent=11 // pred_region
          _
        $region24: #{tpu_custom_call.1} parent=11 // pred_fallthru
          _
        // Predicated region
        $region25: #{tpu_custom_call.1} parent=11 // pred_check
          %p251 = pneg %p154
        $region26: #{tpu_custom_call.1} parent=11 // pred_check_branch
          %253 = sbr.rel (%p251) target = $region28
        $region27: #{tpu_custom_call.1} parent=11 // pred_region
          _
        $region28: #{tpu_custom_call.1} parent=11 // pred_fallthru
          _
        // Predicated region
        $region29: #{tpu_custom_call.1} parent=11 // pred_check
          %p254 = pneg %p175
        $region30: #{tpu_custom_call.1} parent=11 // pred_check_branch
          %256 = sbr.rel (%p254) target = $region32
        $region31: #{tpu_custom_call.1} parent=11 // pred_region
          _
        $region32: #{tpu_custom_call.1} parent=11 // pred_fallthru
          _
      $region12: #{tpu_custom_call.1} parent=5 // pred_fallthru
        _
      %p257 = scmp.lt.s32.totalorder %s18, 2
      // Predicated region
      $region33: #{tpu_custom_call.1} parent=5 // pred_check
        %p258 = pneg %p257
      $region34: #{tpu_custom_call.1} parent=5 // pred_check_branch
        %260 = sbr.rel (%p258) target = $region36
      $region35: #{tpu_custom_call.1} parent=5 // pred_region
        // Predicated region
        $region37: #{tpu_custom_call.1} parent=35 // pred_check
          %p261 = pneg %p38
        $region38: #{tpu_custom_call.1} parent=35 // pred_check_branch
          %263 = sbr.rel (%p261) target = $region40
        $region39: #{tpu_custom_call.1} parent=35 // pred_region
          %s264 = smul.u32 16, %s18
          %p265 = scmp.lt.s32.totalorder %s264, 31
          %s266 = scalar_select %p265, %s264, 31
          %s267 = smul.addr %s266, 8
          %s268 = scalar_lea.vmem %s0, %s267
          %s269 = smul.u32 16, %s18
        $region40: #{tpu_custom_call.1} parent=35 // pred_fallthru
          _
        // Predicated region
        $region41: #{tpu_custom_call.1} parent=35 // pred_check
          %p270 = pneg %p64
        $region42: #{tpu_custom_call.1} parent=35 // pred_check_branch
          %272 = sbr.rel (%p270) target = $region44
        $region43: #{tpu_custom_call.1} parent=35 // pred_region
          %s273 = smul.u32 16, %s18
          %p274 = scmp.lt.s32.totalorder %s273, 31
          %s275 = scalar_select %p274, %s273, 31
          %s276 = smul.addr %s275, 8
          %s277 = scalar_lea.vmem %s1, %s276
          %s278 = smul.u32 16, %s18
        $region44: #{tpu_custom_call.1} parent=35 // pred_fallthru
          _
      $region36: #{tpu_custom_call.1} parent=5 // pred_fallthru
        _
      %p279 = scmp.le.s32.totalorder 1, %s18
      %p280 = scmp.lt.s32.totalorder %s18, 3
      %p281 = pnand %p279, %p280
      %p282 = pneg %p281
      // Predicated region
      $region45: #{tpu_custom_call.1} parent=5 // pred_check
        _
      $region46: #{tpu_custom_call.1} parent=5 // pred_check_branch
        %284 = sbr.rel (%p281) target = $region48
      $region47: #{tpu_custom_call.1} parent=5 // pred_region
        %s285 = ssub.s32 %s18, 1
        %s286 = smul.u32 16, %s23
        %p287 = scmp.lt.s32.totalorder %s286, 31
        %s288 = scalar_select %p287, %s286, 31
        %s289 = smul.addr %s288, 8
        %s290 = scalar_lea.vmem %s0, %s289
        %p291 = pneg %p44
        %p292 = pneg %p41
        %s293 = smul.u32 16, %s23
        %p294 = scmp.lt.s32.totalorder %s293, 31
        %s295 = scalar_select %p294, %s293, 31
        %s296 = smul.addr %s295, 8
        %s297 = scalar_lea.vmem %s1, %s296
        %p298 = pneg %p70
        %p299 = pneg %p67
        %p300 = pneg %p91
        %p301 = pneg %p88
        %p302 = pneg %p112
        %p303 = pneg %p109
        %p304 = pneg %p133
        %p305 = pneg %p130
        %p306 = pneg %p154
        %p307 = pneg %p151
        %p308 = pneg %p175
        %p309 = pneg %p172
        %p310 = pneg %p201
        %p311 = pneg %p198
        %s312 = sand.u32 %s188, 1
        %s313 = scalar_lea.sflag [#allocation3], %s312
        %s314 = sand.u32 %s188, 1
        %s315 = smul.addr %s314, 32
        %s316 = scalar_lea.vmem [#allocation2], %s315
        %p317 = pneg %p227
        %p318 = pneg %p224
        %s319 = smul.u32 4, %s23
        %p320 = scmp.lt.s32.totalorder %s319, 7
        %s321 = scalar_select %p320, %s319, 7
        %s322 = smul.addr %s321, 8
        %s323 = scalar_lea.vmem %s8, %s322
        %s324 = smul.u32 16, %s23
        %p325 = scmp.lt.s32.totalorder %s324, 31
        %s326 = scalar_select %p325, %s324, 31
        %s327 = smul.addr %s326, 8
        %s328 = scalar_lea.vmem %s0, %s327
        %s329 = smul.u32 16, %s23
        %s330 = smul.u32 16, %s23
        %p331 = scmp.lt.s32.totalorder %s330, 31
        %s332 = scalar_select %p331, %s330, 31
        %s333 = smul.addr %s332, 8
        %s334 = scalar_lea.vmem %s1, %s333
        %s335 = smul.u32 16, %s23
        %s336 = smul.u32 4, %s23
        %s337 = smul.u32 4, %s23
        %p338 = scmp.lt.s32.totalorder %s337, 7
        %s339 = scalar_select %p338, %s337, 7
        %s340 = smul.addr %s339, 8
        %s341 = scalar_lea.vmem %s8, %s340
        %s342 = smul.u32 4, %s23
        %v344 = vld [vmem:[%s328] sm:$0xff]
        %v345 = vld [vmem:[%s328 + $0x8] sm:$0xff]
        %v346 = vld [vmem:[%s328 + $0x10] sm:$0xff]
        %v347 = vld [vmem:[%s328 + $0x18] sm:$0xff]
        %v348 = vld [vmem:[%s328 + $0x20] sm:$0xff]
        %v349 = vld [vmem:[%s328 + $0x28] sm:$0xff]
        %v350 = vld [vmem:[%s328 + $0x30] sm:$0xff]
        %v351 = vld [vmem:[%s328 + $0x38] sm:$0xff]
        %v352 = vld [vmem:[%s328 + $0x40] sm:$0xff]
        %v353 = vld [vmem:[%s328 + $0x48] sm:$0xff]
        %v354 = vld [vmem:[%s328 + $0x50] sm:$0xff]
        %v355 = vld [vmem:[%s328 + $0x58] sm:$0xff]
        %v356 = vld [vmem:[%s328 + $0x60] sm:$0xff]
        %v357 = vld [vmem:[%s328 + $0x68] sm:$0xff]
        %v358 = vld [vmem:[%s328 + $0x70] sm:$0xff]
        %v359 = vld [vmem:[%s328 + $0x78] sm:$0xff]
        %v360 = vld [vmem:[%s334] sm:$0xff]
        %v361 = vld [vmem:[%s334 + $0x8] sm:$0xff]
        %v362 = vld [vmem:[%s334 + $0x10] sm:$0xff]
        %v363 = vld [vmem:[%s334 + $0x18] sm:$0xff]
        %v364 = vld [vmem:[%s334 + $0x20] sm:$0xff]
        %v365 = vld [vmem:[%s334 + $0x28] sm:$0xff]
        %v366 = vld [vmem:[%s334 + $0x30] sm:$0xff]
        %v367 = vld [vmem:[%s334 + $0x38] sm:$0xff]
        %v368 = vld [vmem:[%s334 + $0x40] sm:$0xff]
        %v369 = vld [vmem:[%s334 + $0x48] sm:$0xff]
        %v370 = vld [vmem:[%s334 + $0x50] sm:$0xff]
        %v371 = vld [vmem:[%s334 + $0x58] sm:$0xff]
        %v372 = vld [vmem:[%s334 + $0x60] sm:$0xff]
        %v373 = vld [vmem:[%s334 + $0x68] sm:$0xff]
        %v374 = vld [vmem:[%s334 + $0x70] sm:$0xff]
        %v375 = vld [vmem:[%s334 + $0x78] sm:$0xff]
        %v376 = vlaneseq
        %v377 = vand.u32 %v376, 127
        %378 = vset.pattern.permute.xlu0 0
        %379 = vperm.xlu0 %378, %v344
        %v380 = vpop.permute.xlu0 %379
        %381 = vset.pattern.permute.xlu0 0
        %382 = vperm.xlu0 %381, %v345
        %v383 = vpop.permute.xlu0 %382
        %384 = vset.pattern.permute.xlu0 0
        %385 = vperm.xlu0 %384, %v346
        %v386 = vpop.permute.xlu0 %385
        %387 = vset.pattern.permute.xlu0 0
        %388 = vperm.xlu0 %387, %v347
        %v389 = vpop.permute.xlu0 %388
        %390 = vset.pattern.permute.xlu0 0
        %391 = vperm.xlu0 %390, %v348
        %v392 = vpop.permute.xlu0 %391
        %393 = vset.pattern.permute.xlu0 0
        %394 = vperm.xlu0 %393, %v349
        %v395 = vpop.permute.xlu0 %394
        %396 = vset.pattern.permute.xlu0 0
        %397 = vperm.xlu0 %396, %v350
        %v398 = vpop.permute.xlu0 %397
        %399 = vset.pattern.permute.xlu0 0
        %400 = vperm.xlu0 %399, %v351
        %v401 = vpop.permute.xlu0 %400
        %402 = vset.pattern.permute.xlu0 0
        %403 = vperm.xlu0 %402, %v352
        %v404 = vpop.permute.xlu0 %403
        %405 = vset.pattern.permute.xlu0 0
        %406 = vperm.xlu0 %405, %v353
        %v407 = vpop.permute.xlu0 %406
        %408 = vset.pattern.permute.xlu0 0
        %409 = vperm.xlu0 %408, %v354
        %v410 = vpop.permute.xlu0 %409
        %411 = vset.pattern.permute.xlu0 0
        %412 = vperm.xlu0 %411, %v355
        %v413 = vpop.permute.xlu0 %412
        %414 = vset.pattern.permute.xlu0 0
        %415 = vperm.xlu0 %414, %v356
        %v416 = vpop.permute.xlu0 %415
        %417 = vset.pattern.permute.xlu0 0
        %418 = vperm.xlu0 %417, %v357
        %v419 = vpop.permute.xlu0 %418
        %420 = vset.pattern.permute.xlu0 0
        %421 = vperm.xlu0 %420, %v358
        %v422 = vpop.permute.xlu0 %421
        %423 = vset.pattern.permute.xlu0 0
        %424 = vperm.xlu0 %423, %v359
        %v425 = vpop.permute.xlu0 %424
        %vm426 = vcmp.eq.s32.totalorder %v380, %v377
        %vm427 = vcmp.eq.s32.totalorder %v383, %v377
        %vm428 = vcmp.eq.s32.totalorder %v386, %v377
        %vm429 = vcmp.eq.s32.totalorder %v389, %v377
        %vm430 = vcmp.eq.s32.totalorder %v392, %v377
        %vm431 = vcmp.eq.s32.totalorder %v395, %v377
        %vm432 = vcmp.eq.s32.totalorder %v398, %v377
        %vm433 = vcmp.eq.s32.totalorder %v401, %v377
        %vm434 = vcmp.eq.s32.totalorder %v404, %v377
        %vm435 = vcmp.eq.s32.totalorder %v407, %v377
        %vm436 = vcmp.eq.s32.totalorder %v410, %v377
        %vm437 = vcmp.eq.s32.totalorder %v413, %v377
        %vm438 = vcmp.eq.s32.totalorder %v416, %v377
        %vm439 = vcmp.eq.s32.totalorder %v419, %v377
        %vm440 = vcmp.eq.s32.totalorder %v422, %v377
        %vm441 = vcmp.eq.s32.totalorder %v425, %v377
        %v442 = vsel %vm426, 1, 0
        %v443 = vsel %vm427, 1, 0
        %v444 = vsel %vm428, 1, 0
        %v445 = vsel %vm429, 1, 0
        %v446 = vsel %vm430, 1, 0
        %v447 = vsel %vm431, 1, 0
        %v448 = vsel %vm432, 1, 0
        %v449 = vsel %vm433, 1, 0
        %v450 = vsel %vm434, 1, 0
        %v451 = vsel %vm435, 1, 0
        %v452 = vsel %vm436, 1, 0
        %v453 = vsel %vm437, 1, 0
        %v454 = vsel %vm438, 1, 0
        %v455 = vsel %vm439, 1, 0
        %v456 = vsel %vm440, 1, 0
        %v457 = vsel %vm441, 1, 0
        %v458 = vcvt.s32.f32 %v442
        %v459 = vcvt.s32.f32 %v443
        %v460 = vcvt.s32.f32 %v444
        %v461 = vcvt.s32.f32 %v445
        %v462 = vcvt.s32.f32 %v446
        %v463 = vcvt.s32.f32 %v447
        %v464 = vcvt.s32.f32 %v448
        %v465 = vcvt.s32.f32 %v449
        %v466 = vcvt.s32.f32 %v450
        %v467 = vcvt.s32.f32 %v451
        %v468 = vcvt.s32.f32 %v452
        %v469 = vcvt.s32.f32 %v453
        %v470 = vcvt.s32.f32 %v454
        %v471 = vcvt.s32.f32 %v455
        %v472 = vcvt.s32.f32 %v456
        %v473 = vcvt.s32.f32 %v457
        %v474 = vpack.c.bf16 %v459, %v458
        %v475 = vpack.c.bf16 %v461, %v460
        %v476 = vpack.c.bf16 %v463, %v462
        %v477 = vpack.c.bf16 %v465, %v464
        %v478 = vpack.c.bf16 %v467, %v466
        %v479 = vpack.c.bf16 %v469, %v468
        %v480 = vpack.c.bf16 %v471, %v470
        %v481 = vpack.c.bf16 %v473, %v472
        %v482 = vld [vmem:[%s2] sm:$0xf]
        %v483 = vld [vmem:[%s2 + $0x4] sm:$0xf]
        %v484 = vld [vmem:[%s2 + $0x8] sm:$0xf]
        %v485 = vld [vmem:[%s2 + $0xc] sm:$0xf]
        %v486 = vld [vmem:[%s2 + $0x10] sm:$0xf]
        %v487 = vld [vmem:[%s2 + $0x14] sm:$0xf]
        %v488 = vld [vmem:[%s2 + $0x18] sm:$0xf]
        %v489 = vld [vmem:[%s2 + $0x1c] sm:$0xf]
        %v490 = vld [vmem:[%s2 + $0x20] sm:$0xf]
        %v491 = vld [vmem:[%s2 + $0x24] sm:$0xf]
        %v492 = vld [vmem:[%s2 + $0x28] sm:$0xf]
        %v493 = vld [vmem:[%s2 + $0x2c] sm:$0xf]
        %v494 = vld [vmem:[%s2 + $0x30] sm:$0xf]
        %v495 = vld [vmem:[%s2 + $0x34] sm:$0xf]
        %v496 = vld [vmem:[%s2 + $0x38] sm:$0xf]
        %v497 = vld [vmem:[%s2 + $0x3c] sm:$0xf]
        %v498 = vld [vmem:[%s3] sm:$0xf]
        %v499 = vld [vmem:[%s3 + $0x4] sm:$0xf]
        %v500 = vld [vmem:[%s3 + $0x8] sm:$0xf]
        %v501 = vld [vmem:[%s3 + $0xc] sm:$0xf]
        %v502 = vld [vmem:[%s3 + $0x10] sm:$0xf]
        %v503 = vld [vmem:[%s3 + $0x14] sm:$0xf]
        %v504 = vld [vmem:[%s3 + $0x18] sm:$0xf]
        %v505 = vld [vmem:[%s3 + $0x1c] sm:$0xf]
        %v506 = vld [vmem:[%s3 + $0x20] sm:$0xf]
        %v507 = vld [vmem:[%s3 + $0x24] sm:$0xf]
        %v508 = vld [vmem:[%s3 + $0x28] sm:$0xf]
        %v509 = vld [vmem:[%s3 + $0x2c] sm:$0xf]
        %v510 = vld [vmem:[%s3 + $0x30] sm:$0xf]
        %v511 = vld [vmem:[%s3 + $0x34] sm:$0xf]
        %v512 = vld [vmem:[%s3 + $0x38] sm:$0xf]
        %v513 = vld [vmem:[%s3 + $0x3c] sm:$0xf]
        %v514 = vunpack.c.l.bf16 %v498
        %v515 = vunpack.c.l.bf16 %v499
        %v516 = vunpack.c.l.bf16 %v500
        %v517 = vunpack.c.l.bf16 %v501
        %v518 = vunpack.c.l.bf16 %v502
        %v519 = vunpack.c.l.bf16 %v503
        %v520 = vunpack.c.l.bf16 %v504
        %v521 = vunpack.c.l.bf16 %v505
        %v522 = vunpack.c.l.bf16 %v506
        %v523 = vunpack.c.l.bf16 %v507
        %v524 = vunpack.c.l.bf16 %v508
        %v525 = vunpack.c.l.bf16 %v509
        %v526 = vunpack.c.l.bf16 %v510
        %v527 = vunpack.c.l.bf16 %v511
        %v528 = vunpack.c.l.bf16 %v512
        %v529 = vunpack.c.l.bf16 %v513
        %v546 = vunpack.c.l.b16 %v482
        %v547 = vunpack.c.l.b16 %v483
        %v548 = vunpack.c.l.b16 %v484
        %v549 = vunpack.c.l.b16 %v485
        %v550 = vunpack.c.l.b16 %v486
        %v551 = vunpack.c.l.b16 %v487
        %v552 = vunpack.c.l.b16 %v488
        %v553 = vunpack.c.l.b16 %v489
        %v554 = vunpack.c.l.b16 %v490
        %v555 = vunpack.c.l.b16 %v491
        %v556 = vunpack.c.l.b16 %v492
        %v557 = vunpack.c.l.b16 %v493
        %v558 = vunpack.c.l.b16 %v494
        %v559 = vunpack.c.l.b16 %v495
        %v560 = vunpack.c.l.b16 %v496
        %v561 = vunpack.c.l.b16 %v497
        %v562 = vpack.c.b16 %v547, %v546
        %v563 = vpack.c.b16 %v549, %v548
        %v564 = vpack.c.b16 %v551, %v550
        %v565 = vpack.c.b16 %v553, %v552
        %v566 = vpack.c.b16 %v555, %v554
        %v567 = vpack.c.b16 %v557, %v556
        %v568 = vpack.c.b16 %v559, %v558
        %v569 = vpack.c.b16 %v561, %v560
        %578 = vmatprep.subr.bf16.mxu0 0
        %579 = vmatpush1.bf16.msra.mxu0 %v569
        %580 = vmatprep.subr.bf16.mxu0 0
        %581 = vmatpush1.bf16.msra.mxu0 %v568
        %582 = vmatprep.subr.bf16.mxu0 0
        %583 = vmatpush1.bf16.msra.mxu0 %v567
        %584 = vmatprep.subr.bf16.mxu0 0
        %585 = vmatpush1.bf16.msra.mxu0 %v566
        %586 = vmatprep.subr.bf16.mxu0 0
        %587 = vmatpush1.bf16.msra.mxu0 %v565
        %588 = vmatprep.subr.bf16.mxu0 0
        %589 = vmatpush1.bf16.msra.mxu0 %v564
        %590 = vmatprep.subr.bf16.mxu0 0
        %591 = vmatpush1.bf16.msra.mxu0 %v563
        %592 = vmatprep.subr.bf16.mxu0 0
        %593 = vmatpush1.bf16.msra.mxu0 %v562
        %594 = vmatprep.subr.bf16.mxu0 0
        %595 = vmatpush2.bf16.msra.mxu0 0
        %596 = vmatprep.subr.bf16.mxu0 0
        %597 = vmatpush2.bf16.msra.mxu0 0
        %598 = vmatprep.subr.bf16.mxu0 0
        %599 = vmatpush2.bf16.msra.mxu0 0
        %600 = vmatprep.subr.bf16.mxu0 0
        %601 = vmatpush2.bf16.msra.mxu0 0
        %602 = vmatprep.subr.bf16.mxu0 0
        %603 = vmatpush2.bf16.msra.mxu0 0
        %604 = vmatprep.subr.bf16.mxu0 0
        %605 = vmatpush2.bf16.msra.mxu0 0
        %606 = vmatprep.subr.bf16.mxu0 0
        %607 = vmatpush2.bf16.msra.mxu0 0
        %608 = vmatprep.subr.bf16.mxu0 0
        %609 = vmatpush2.bf16.msra.mxu0 0
        %610 = vmatprep.mubr.bf16.mxu0 0
        %611 = vmatmul.mubr.bf16.gmra.mxu0 %v474
        %v612 = vpop.f32.mrf.mxu0
        %v613 = vadd.f32 %v514, %v612
        %v614 = vpop.f32.mrf.mxu0
        %v615 = vpop.f32.mrf.mxu0
        %v616 = vadd.f32 %v515, %v615
        %v617 = vpop.f32.mrf.mxu0
        %618 = vmatprep.mubr.bf16.mxu0 0
        %619 = vmatmul.mubr.bf16.gmra.mxu0 %v475
        %v620 = vpop.f32.mrf.mxu0
        %v621 = vadd.f32 %v516, %v620
        %v622 = vpop.f32.mrf.mxu0
        %v623 = vpop.f32.mrf.mxu0
        %v624 = vadd.f32 %v517, %v623
        %v625 = vpop.f32.mrf.mxu0
        %626 = vmatprep.mubr.bf16.mxu0 0
        %627 = vmatmul.mubr.bf16.gmra.mxu0 %v476
        %v628 = vpop.f32.mrf.mxu0
        %v629 = vadd.f32 %v518, %v628
        %v630 = vpop.f32.mrf.mxu0
        %v631 = vpop.f32.mrf.mxu0
        %v632 = vadd.f32 %v519, %v631
        %v633 = vpop.f32.mrf.mxu0
        %634 = vmatprep.mubr.bf16.mxu0 0
        %635 = vmatmul.mubr.bf16.gmra.mxu0 %v477
        %v636 = vpop.f32.mrf.mxu0
        %v637 = vadd.f32 %v520, %v636
        %v638 = vpop.f32.mrf.mxu0
        %v639 = vpop.f32.mrf.mxu0
        %v640 = vadd.f32 %v521, %v639
        %v641 = vpop.f32.mrf.mxu0
        %642 = vmatprep.mubr.bf16.mxu0 0
        %643 = vmatmul.mubr.bf16.gmra.mxu0 %v478
        %v644 = vpop.f32.mrf.mxu0
        %v645 = vadd.f32 %v522, %v644
        %v646 = vpop.f32.mrf.mxu0
        %v647 = vpop.f32.mrf.mxu0
        %v648 = vadd.f32 %v523, %v647
        %v649 = vpop.f32.mrf.mxu0
        %650 = vmatprep.mubr.bf16.mxu0 0
        %651 = vmatmul.mubr.bf16.gmra.mxu0 %v479
        %v652 = vpop.f32.mrf.mxu0
        %v653 = vadd.f32 %v524, %v652
        %v654 = vpop.f32.mrf.mxu0
        %v655 = vpop.f32.mrf.mxu0
        %v656 = vadd.f32 %v525, %v655
        %v657 = vpop.f32.mrf.mxu0
        %658 = vmatprep.mubr.bf16.mxu0 0
        %659 = vmatmul.mubr.bf16.gmra.mxu0 %v480
        %v660 = vpop.f32.mrf.mxu0
        %v661 = vadd.f32 %v526, %v660
        %v662 = vpop.f32.mrf.mxu0
        %v663 = vpop.f32.mrf.mxu0
        %v664 = vadd.f32 %v527, %v663
        %v665 = vpop.f32.mrf.mxu0
        %666 = vmatprep.mubr.bf16.mxu0 0
        %667 = vmatmul.mubr.bf16.gmra.mxu0 %v481
        %v668 = vpop.f32.mrf.mxu0
        %v669 = vadd.f32 %v528, %v668
        %v670 = vpop.f32.mrf.mxu0
        %v671 = vpop.f32.mrf.mxu0
        %v672 = vadd.f32 %v529, %v671
        %v673 = vpop.f32.mrf.mxu0
        %674 = vdwg.mxu0
        %676 = vset.pattern.permute.xlu0 0
        %677 = vperm.xlu0 %676, %v360
        %v678 = vpop.permute.xlu0 %677
        %681 = vset.pattern.permute.xlu0 0
        %682 = vperm.xlu0 %681, %v361
        %v683 = vpop.permute.xlu0 %682
        %686 = vset.pattern.permute.xlu0 0
        %687 = vperm.xlu0 %686, %v362
        %v688 = vpop.permute.xlu0 %687
        %691 = vset.pattern.permute.xlu0 0
        %692 = vperm.xlu0 %691, %v363
        %v693 = vpop.permute.xlu0 %692
        %696 = vset.pattern.permute.xlu0 0
        %697 = vperm.xlu0 %696, %v364
        %v698 = vpop.permute.xlu0 %697
        %701 = vset.pattern.permute.xlu0 0
        %702 = vperm.xlu0 %701, %v365
        %v703 = vpop.permute.xlu0 %702
        %706 = vset.pattern.permute.xlu0 0
        %707 = vperm.xlu0 %706, %v366
        %v708 = vpop.permute.xlu0 %707
        %711 = vset.pattern.permute.xlu0 0
        %712 = vperm.xlu0 %711, %v367
        %v713 = vpop.permute.xlu0 %712
        %716 = vset.pattern.permute.xlu0 0
        %717 = vperm.xlu0 %716, %v368
        %v718 = vpop.permute.xlu0 %717
        %721 = vset.pattern.permute.xlu0 0
        %722 = vperm.xlu0 %721, %v369
        %v723 = vpop.permute.xlu0 %722
        %726 = vset.pattern.permute.xlu0 0
        %727 = vperm.xlu0 %726, %v370
        %v728 = vpop.permute.xlu0 %727
        %731 = vset.pattern.permute.xlu0 0
        %732 = vperm.xlu0 %731, %v371
        %v733 = vpop.permute.xlu0 %732
        %736 = vset.pattern.permute.xlu0 0
        %737 = vperm.xlu0 %736, %v372
        %v738 = vpop.permute.xlu0 %737
        %741 = vset.pattern.permute.xlu0 0
        %742 = vperm.xlu0 %741, %v373
        %v743 = vpop.permute.xlu0 %742
        %746 = vset.pattern.permute.xlu0 0
        %747 = vperm.xlu0 %746, %v374
        %v748 = vpop.permute.xlu0 %747
        %751 = vset.pattern.permute.xlu0 0
        %752 = vperm.xlu0 %751, %v375
        %v753 = vpop.permute.xlu0 %752
        %v755 = vmul.f32 %v613, %v678
        %v756 = vmul.f32 %v616, %v683
        %v757 = vmul.f32 %v621, %v688
        %v758 = vmul.f32 %v624, %v693
        %v759 = vmul.f32 %v629, %v698
        %v760 = vmul.f32 %v632, %v703
        %v761 = vmul.f32 %v637, %v708
        %v762 = vmul.f32 %v640, %v713
        %v763 = vmul.f32 %v645, %v718
        %v764 = vmul.f32 %v648, %v723
        %v765 = vmul.f32 %v653, %v728
        %v766 = vmul.f32 %v656, %v733
        %v767 = vmul.f32 %v661, %v738
        %v768 = vmul.f32 %v664, %v743
        %v769 = vmul.f32 %v669, %v748
        %v770 = vmul.f32 %v672, %v753
        %v771 = vrot.slane %v755, 7
        %v772 = vrot.slane %v756, 7
        %v773 = vrot.slane %v757, 7
        %v774 = vrot.slane %v758, 7
        %v775 = vrot.slane %v759, 7
        %v776 = vrot.slane %v760, 7
        %v777 = vrot.slane %v761, 7
        %v778 = vrot.slane %v762, 7
        %v779 = vrot.slane %v763, 7
        %v780 = vrot.slane %v764, 7
        %v781 = vrot.slane %v765, 7
        %v782 = vrot.slane %v766, 7
        %v783 = vrot.slane %v767, 7
        %v784 = vrot.slane %v768, 7
        %v785 = vrot.slane %v769, 7
        %v786 = vrot.slane %v770, 7
        %v787 = vlaneseq
        %v788 = vshrl.u32 %v787, 7
        %vm789 = vcmp.lt.s32.totalorder %v788, 1
        %v790 = vsel %vm789, %v785, %v786
        %v791 = vsel %vm789, %v784, %v785
        %v792 = vsel %vm789, %v783, %v784
        %v793 = vsel %vm789, %v782, %v783
        %v794 = vsel %vm789, %v781, %v782
        %v795 = vsel %vm789, %v780, %v781
        %v796 = vsel %vm789, %v779, %v780
        %v797 = vsel %vm789, %v778, %v779
        %v798 = vsel %vm789, %v777, %v778
        %v799 = vsel %vm789, %v776, %v777
        %v800 = vsel %vm789, %v775, %v776
        %v801 = vsel %vm789, %v774, %v775
        %v802 = vsel %vm789, %v773, %v774
        %v803 = vsel %vm789, %v772, %v773
        %v804 = vsel %vm789, %v771, %v772
        %v805 = vsel %vm789, %v786, %v771
        %v806 = vld [vmem:[%s6] sm:$0xff]
        %v807 = vld [vmem:[%s6 + $0x8] sm:$0xff]
        %v808 = vld [vmem:[%s6 + $0x10] sm:$0xff]
        %v809 = vld [vmem:[%s6 + $0x18] sm:$0xff]
        %v810 = vld [vmem:[%s6 + $0x20] sm:$0xff]
        %v811 = vld [vmem:[%s6 + $0x28] sm:$0xff]
        %v812 = vld [vmem:[%s6 + $0x30] sm:$0xff]
        %v813 = vld [vmem:[%s6 + $0x38] sm:$0xff]
        %v814 = vld [vmem:[%s6 + $0x40] sm:$0xff]
        %v815 = vld [vmem:[%s6 + $0x48] sm:$0xff]
        %v816 = vld [vmem:[%s6 + $0x50] sm:$0xff]
        %v817 = vld [vmem:[%s6 + $0x58] sm:$0xff]
        %v818 = vld [vmem:[%s6 + $0x60] sm:$0xff]
        %v819 = vld [vmem:[%s6 + $0x68] sm:$0xff]
        %v820 = vld [vmem:[%s6 + $0x70] sm:$0xff]
        %v821 = vld [vmem:[%s6 + $0x78] sm:$0xff]
        %823 = vset.pattern.permute.xlu0 0
        %824 = vperm.xlu0 %823, %v806
        %v825 = vpop.permute.xlu0 %824
        %828 = vset.pattern.permute.xlu0 0
        %829 = vperm.xlu0 %828, %v807
        %v830 = vpop.permute.xlu0 %829
        %833 = vset.pattern.permute.xlu0 0
        %834 = vperm.xlu0 %833, %v808
        %v835 = vpop.permute.xlu0 %834
        %838 = vset.pattern.permute.xlu0 0
        %839 = vperm.xlu0 %838, %v809
        %v840 = vpop.permute.xlu0 %839
        %843 = vset.pattern.permute.xlu0 0
        %844 = vperm.xlu0 %843, %v810
        %v845 = vpop.permute.xlu0 %844
        %848 = vset.pattern.permute.xlu0 0
        %849 = vperm.xlu0 %848, %v811
        %v850 = vpop.permute.xlu0 %849
        %853 = vset.pattern.permute.xlu0 0
        %854 = vperm.xlu0 %853, %v812
        %v855 = vpop.permute.xlu0 %854
        %858 = vset.pattern.permute.xlu0 0
        %859 = vperm.xlu0 %858, %v813
        %v860 = vpop.permute.xlu0 %859
        %863 = vset.pattern.permute.xlu0 0
        %864 = vperm.xlu0 %863, %v814
        %v865 = vpop.permute.xlu0 %864
        %868 = vset.pattern.permute.xlu0 0
        %869 = vperm.xlu0 %868, %v815
        %v870 = vpop.permute.xlu0 %869
        %873 = vset.pattern.permute.xlu0 0
        %874 = vperm.xlu0 %873, %v816
        %v875 = vpop.permute.xlu0 %874
        %878 = vset.pattern.permute.xlu0 0
        %879 = vperm.xlu0 %878, %v817
        %v880 = vpop.permute.xlu0 %879
        %883 = vset.pattern.permute.xlu0 0
        %884 = vperm.xlu0 %883, %v818
        %v885 = vpop.permute.xlu0 %884
        %888 = vset.pattern.permute.xlu0 0
        %889 = vperm.xlu0 %888, %v819
        %v890 = vpop.permute.xlu0 %889
        %893 = vset.pattern.permute.xlu0 0
        %894 = vperm.xlu0 %893, %v820
        %v895 = vpop.permute.xlu0 %894
        %898 = vset.pattern.permute.xlu0 0
        %899 = vperm.xlu0 %898, %v821
        %v900 = vpop.permute.xlu0 %899
        %v902 = vmul.f32 %v805, %v825
        %v903 = vmul.f32 %v804, %v830
        %v904 = vmul.f32 %v803, %v835
        %v905 = vmul.f32 %v802, %v840
        %v906 = vmul.f32 %v801, %v845
        %v907 = vmul.f32 %v800, %v850
        %v908 = vmul.f32 %v799, %v855
        %v909 = vmul.f32 %v798, %v860
        %v910 = vmul.f32 %v797, %v865
        %v911 = vmul.f32 %v796, %v870
        %v912 = vmul.f32 %v795, %v875
        %v913 = vmul.f32 %v794, %v880
        %v914 = vmul.f32 %v793, %v885
        %v915 = vmul.f32 %v792, %v890
        %v916 = vmul.f32 %v791, %v895
        %v917 = vmul.f32 %v790, %v900
        %v918 = vpack.c.bf16 %v903, %v902
        %v919 = vpack.c.bf16 %v905, %v904
        %v920 = vpack.c.bf16 %v907, %v906
        %v921 = vpack.c.bf16 %v909, %v908
        %v922 = vpack.c.bf16 %v911, %v910
        %v923 = vpack.c.bf16 %v913, %v912
        %v924 = vpack.c.bf16 %v915, %v914
        %v925 = vpack.c.bf16 %v917, %v916
        %v926 = vpack.c.bf16 %v756, %v755
        %v927 = vpack.c.bf16 %v758, %v757
        %v928 = vpack.c.bf16 %v760, %v759
        %v929 = vpack.c.bf16 %v762, %v761
        %v930 = vpack.c.bf16 %v764, %v763
        %v931 = vpack.c.bf16 %v766, %v765
        %v932 = vpack.c.bf16 %v768, %v767
        %v933 = vpack.c.bf16 %v770, %v769
        %v934 = vrot.slane %v755, 1
        %v935 = vrot.slane %v756, 1
        %v936 = vrot.slane %v757, 1
        %v937 = vrot.slane %v758, 1
        %v938 = vrot.slane %v759, 1
        %v939 = vrot.slane %v760, 1
        %v940 = vrot.slane %v761, 1
        %v941 = vrot.slane %v762, 1
        %v942 = vrot.slane %v763, 1
        %v943 = vrot.slane %v764, 1
        %v944 = vrot.slane %v765, 1
        %v945 = vrot.slane %v766, 1
        %v946 = vrot.slane %v767, 1
        %v947 = vrot.slane %v768, 1
        %v948 = vrot.slane %v769, 1
        %v949 = vrot.slane %v770, 1
        %vm950 = vcmp.lt.s32.totalorder %v788, 7
        %v951 = vsel %vm950, %v948, %v949
        %v952 = vsel %vm950, %v947, %v948
        %v953 = vsel %vm950, %v946, %v947
        %v954 = vsel %vm950, %v945, %v946
        %v955 = vsel %vm950, %v944, %v945
        %v956 = vsel %vm950, %v943, %v944
        %v957 = vsel %vm950, %v942, %v943
        %v958 = vsel %vm950, %v941, %v942
        %v959 = vsel %vm950, %v940, %v941
        %v960 = vsel %vm950, %v939, %v940
        %v961 = vsel %vm950, %v938, %v939
        %v962 = vsel %vm950, %v937, %v938
        %v963 = vsel %vm950, %v936, %v937
        %v964 = vsel %vm950, %v935, %v936
        %v965 = vsel %vm950, %v934, %v935
        %v966 = vsel %vm950, %v949, %v934
        %s967 = scalar_lea.vmem %s6, 256
        %v968 = vld [vmem:[%s967] sm:$0xff]
        %v969 = vld [vmem:[%s967 + $0x8] sm:$0xff]
        %v970 = vld [vmem:[%s967 + $0x10] sm:$0xff]
        %v971 = vld [vmem:[%s967 + $0x18] sm:$0xff]
        %v972 = vld [vmem:[%s967 + $0x20] sm:$0xff]
        %v973 = vld [vmem:[%s967 + $0x28] sm:$0xff]
        %v974 = vld [vmem:[%s967 + $0x30] sm:$0xff]
        %v975 = vld [vmem:[%s967 + $0x38] sm:$0xff]
        %v976 = vld [vmem:[%s967 + $0x40] sm:$0xff]
        %v977 = vld [vmem:[%s967 + $0x48] sm:$0xff]
        %v978 = vld [vmem:[%s967 + $0x50] sm:$0xff]
        %v979 = vld [vmem:[%s967 + $0x58] sm:$0xff]
        %v980 = vld [vmem:[%s967 + $0x60] sm:$0xff]
        %v981 = vld [vmem:[%s967 + $0x68] sm:$0xff]
        %v982 = vld [vmem:[%s967 + $0x70] sm:$0xff]
        %v983 = vld [vmem:[%s967 + $0x78] sm:$0xff]
        %985 = vset.pattern.permute.xlu0 0
        %986 = vperm.xlu0 %985, %v968
        %v987 = vpop.permute.xlu0 %986
        %990 = vset.pattern.permute.xlu0 0
        %991 = vperm.xlu0 %990, %v969
        %v992 = vpop.permute.xlu0 %991
        %995 = vset.pattern.permute.xlu0 0
        %996 = vperm.xlu0 %995, %v970
        %v997 = vpop.permute.xlu0 %996
        %1000 = vset.pattern.permute.xlu0 0
        %1001 = vperm.xlu0 %1000, %v971
        %v1002 = vpop.permute.xlu0 %1001
        %1005 = vset.pattern.permute.xlu0 0
        %1006 = vperm.xlu0 %1005, %v972
        %v1007 = vpop.permute.xlu0 %1006
        %1010 = vset.pattern.permute.xlu0 0
        %1011 = vperm.xlu0 %1010, %v973
        %v1012 = vpop.permute.xlu0 %1011
        %1015 = vset.pattern.permute.xlu0 0
        %1016 = vperm.xlu0 %1015, %v974
        %v1017 = vpop.permute.xlu0 %1016
        %1020 = vset.pattern.permute.xlu0 0
        %1021 = vperm.xlu0 %1020, %v975
        %v1022 = vpop.permute.xlu0 %1021
        %1025 = vset.pattern.permute.xlu0 0
        %1026 = vperm.xlu0 %1025, %v976
        %v1027 = vpop.permute.xlu0 %1026
        %1030 = vset.pattern.permute.xlu0 0
        %1031 = vperm.xlu0 %1030, %v977
        %v1032 = vpop.permute.xlu0 %1031
        %1035 = vset.pattern.permute.xlu0 0
        %1036 = vperm.xlu0 %1035, %v978
        %v1037 = vpop.permute.xlu0 %1036
        %1040 = vset.pattern.permute.xlu0 0
        %1041 = vperm.xlu0 %1040, %v979
        %v1042 = vpop.permute.xlu0 %1041
        %1045 = vset.pattern.permute.xlu0 0
        %1046 = vperm.xlu0 %1045, %v980
        %v1047 = vpop.permute.xlu0 %1046
        %1050 = vset.pattern.permute.xlu0 0
        %1051 = vperm.xlu0 %1050, %v981
        %v1052 = vpop.permute.xlu0 %1051
        %1055 = vset.pattern.permute.xlu0 0
        %1056 = vperm.xlu0 %1055, %v982
        %v1057 = vpop.permute.xlu0 %1056
        %1060 = vset.pattern.permute.xlu0 0
        %1061 = vperm.xlu0 %1060, %v983
        %v1062 = vpop.permute.xlu0 %1061
        %v1064 = vmul.f32 %v965, %v987
        %v1065 = vmul.f32 %v964, %v992
        %v1066 = vmul.f32 %v963, %v997
        %v1067 = vmul.f32 %v962, %v1002
        %v1068 = vmul.f32 %v961, %v1007
        %v1069 = vmul.f32 %v960, %v1012
        %v1070 = vmul.f32 %v959, %v1017
        %v1071 = vmul.f32 %v958, %v1022
        %v1072 = vmul.f32 %v957, %v1027
        %v1073 = vmul.f32 %v956, %v1032
        %v1074 = vmul.f32 %v955, %v1037
        %v1075 = vmul.f32 %v954, %v1042
        %v1076 = vmul.f32 %v953, %v1047
        %v1077 = vmul.f32 %v952, %v1052
        %v1078 = vmul.f32 %v951, %v1057
        %v1079 = vmul.f32 %v966, %v1062
        %v1080 = vpack.c.bf16 %v1065, %v1064
        %v1081 = vpack.c.bf16 %v1067, %v1066
        %v1082 = vpack.c.bf16 %v1069, %v1068
        %v1083 = vpack.c.bf16 %v1071, %v1070
        %v1084 = vpack.c.bf16 %v1073, %v1072
        %v1085 = vpack.c.bf16 %v1075, %v1074
        %v1086 = vpack.c.bf16 %v1077, %v1076
        %v1087 = vpack.c.bf16 %v1079, %v1078
        %1096 = vrot.lane.b32.xlu0 %v926, 32
        %v1097 = vpop.permute.xlu0 %1096
        %1098 = vrot.lane.b32.xlu0 %v927, 32
        %v1099 = vpop.permute.xlu0 %1098
        %1100 = vrot.lane.b32.xlu0 %v928, 32
        %v1101 = vpop.permute.xlu0 %1100
        %1102 = vrot.lane.b32.xlu0 %v929, 32
        %v1103 = vpop.permute.xlu0 %1102
        %1104 = vrot.lane.b32.xlu0 %v930, 32
        %v1105 = vpop.permute.xlu0 %1104
        %1106 = vrot.lane.b32.xlu0 %v931, 32
        %v1107 = vpop.permute.xlu0 %1106
        %1108 = vrot.lane.b32.xlu0 %v932, 32
        %v1109 = vpop.permute.xlu0 %1108
        %1110 = vrot.lane.b32.xlu0 %v933, 32
        %v1111 = vpop.permute.xlu0 %1110
        %1120 = vrot.lane.b32.xlu0 %v1080, 64
        %v1121 = vpop.permute.xlu0 %1120
        %1122 = vrot.lane.b32.xlu0 %v1081, 64
        %v1123 = vpop.permute.xlu0 %1122
        %1124 = vrot.lane.b32.xlu0 %v1082, 64
        %v1125 = vpop.permute.xlu0 %1124
        %1126 = vrot.lane.b32.xlu0 %v1083, 64
        %v1127 = vpop.permute.xlu0 %1126
        %1128 = vrot.lane.b32.xlu0 %v1084, 64
        %v1129 = vpop.permute.xlu0 %1128
        %1130 = vrot.lane.b32.xlu0 %v1085, 64
        %v1131 = vpop.permute.xlu0 %1130
        %1132 = vrot.lane.b32.xlu0 %v1086, 64
        %v1133 = vpop.permute.xlu0 %1132
        %1134 = vrot.lane.b32.xlu0 %v1087, 64
        %v1135 = vpop.permute.xlu0 %1134
        %vm1136 = vcmask 261120
        %v1139 = vsel %vm1136, %v918, %v1097
        %v1142 = vsel %vm1136, %v919, %v1099
        %v1145 = vsel %vm1136, %v920, %v1101
        %v1148 = vsel %vm1136, %v921, %v1103
        %v1151 = vsel %vm1136, %v922, %v1105
        %v1154 = vsel %vm1136, %v923, %v1107
        %v1157 = vsel %vm1136, %v924, %v1109
        %v1160 = vsel %vm1136, %v925, %v1111
        %vm1161 = vcmask 523264
        %v1163 = vsel %vm1161, %v1139, %v1121
        %v1165 = vsel %vm1161, %v1142, %v1123
        %v1167 = vsel %vm1161, %v1145, %v1125
        %v1169 = vsel %vm1161, %v1148, %v1127
        %v1171 = vsel %vm1161, %v1151, %v1129
        %v1173 = vsel %vm1161, %v1154, %v1131
        %v1175 = vsel %vm1161, %v1157, %v1133
        %v1177 = vsel %vm1161, %v1160, %v1135
        %v1178 = vld [vmem:[%s4] sm:$0xf]
        %v1179 = vld [vmem:[%s4 + $0x4] sm:$0xf]
        %v1180 = vld [vmem:[%s4 + $0x8] sm:$0xf]
        %v1181 = vld [vmem:[%s4 + $0xc] sm:$0xf]
        %v1182 = vld [vmem:[%s4 + $0x10] sm:$0xf]
        %v1183 = vld [vmem:[%s4 + $0x14] sm:$0xf]
        %v1184 = vld [vmem:[%s4 + $0x18] sm:$0xf]
        %v1185 = vld [vmem:[%s4 + $0x1c] sm:$0xf]
        %v1186 = vld [vmem:[%s4 + $0x20] sm:$0xf]
        %v1187 = vld [vmem:[%s4 + $0x24] sm:$0xf]
        %v1188 = vld [vmem:[%s4 + $0x28] sm:$0xf]
        %v1189 = vld [vmem:[%s4 + $0x2c] sm:$0xf]
        %v1190 = vld [vmem:[%s5] sm:$0x1]
        %v1192 = vlaneseq
        %v1193 = vshrl.u32 %v1192, 7
        %v1194 = vsub.s32 0, %v1193
        %v1195 = vrot.slane %v1190, %v1194
        %v1209 = vunpack.c.l.b16 %v1178
        %v1210 = vunpack.c.l.b16 %v1179
        %v1211 = vunpack.c.l.b16 %v1180
        %v1212 = vunpack.c.l.b16 %v1181
        %v1213 = vunpack.c.l.b16 %v1182
        %v1214 = vunpack.c.l.b16 %v1183
        %v1215 = vunpack.c.l.b16 %v1184
        %v1216 = vunpack.c.l.b16 %v1185
        %v1217 = vunpack.c.l.b16 %v1186
        %v1218 = vunpack.c.l.b16 %v1187
        %v1219 = vunpack.c.l.b16 %v1188
        %v1220 = vunpack.c.l.b16 %v1189
        %v1221 = vpack.c.b16 %v1210, %v1209
        %v1222 = vpack.c.b16 %v1212, %v1211
        %v1223 = vpack.c.b16 %v1214, %v1213
        %v1224 = vpack.c.b16 %v1216, %v1215
        %v1225 = vpack.c.b16 %v1218, %v1217
        %v1226 = vpack.c.b16 %v1220, %v1219
        %vm1233 = vcmask 785408
        %v1234 = vsel %vm1233, %v1163, 0
        %v1236 = vsel %vm1233, %v1165, 0
        %v1238 = vsel %vm1233, %v1167, 0
        %v1240 = vsel %vm1233, %v1169, 0
        %v1242 = vsel %vm1233, %v1171, 0
        %v1244 = vsel %vm1233, %v1173, 0
        %v1246 = vsel %vm1233, %v1175, 0
        %v1248 = vsel %vm1233, %v1177, 0
        %1250 = vmatprep.subr.bf16.mxu0 0
        %1251 = vmatpush1.bf16.msra.mxu0 0
        %1252 = vmatprep.subr.bf16.mxu0 0
        %1253 = vmatpush1.bf16.msra.mxu0 0
        %1254 = vmatprep.subr.bf16.mxu0 0
        %1255 = vmatpush1.bf16.msra.mxu0 %v1226
        %1256 = vmatprep.subr.bf16.mxu0 0
        %1257 = vmatpush1.bf16.msra.mxu0 %v1225
        %1258 = vmatprep.subr.bf16.mxu0 0
        %1259 = vmatpush1.bf16.msra.mxu0 %v1224
        %1260 = vmatprep.subr.bf16.mxu0 0
        %1261 = vmatpush1.bf16.msra.mxu0 %v1223
        %1262 = vmatprep.subr.bf16.mxu0 0
        %1263 = vmatpush1.bf16.msra.mxu0 %v1222
        %1264 = vmatprep.subr.bf16.mxu0 0
        %1265 = vmatpush1.bf16.msra.mxu0 %v1221
        %1266 = vmatprep.subr.bf16.mxu0 0
        %1267 = vmatpush2.bf16.msra.mxu0 0
        %1268 = vmatprep.subr.bf16.mxu0 0
        %1269 = vmatpush2.bf16.msra.mxu0 0
        %1270 = vmatprep.subr.bf16.mxu0 0
        %1271 = vmatpush2.bf16.msra.mxu0 0
        %1272 = vmatprep.subr.bf16.mxu0 0
        %1273 = vmatpush2.bf16.msra.mxu0 0
        %1274 = vmatprep.subr.bf16.mxu0 0
        %1275 = vmatpush2.bf16.msra.mxu0 0
        %1276 = vmatprep.subr.bf16.mxu0 0
        %1277 = vmatpush2.bf16.msra.mxu0 0
        %1278 = vmatprep.subr.bf16.mxu0 0
        %1279 = vmatpush2.bf16.msra.mxu0 0
        %1280 = vmatprep.subr.bf16.mxu0 0
        %1281 = vmatpush2.bf16.msra.mxu0 0
        %1282 = vmatprep.mubr.bf16.mxu0 0
        %1283 = vmatmul.mubr.bf16.gmra.mxu0 %v1234
        %v1284 = vpop.f32.mrf.mxu0
        %v1285 = vadd.f32 %v1195, %v1284
        %v1286 = vpop.f32.mrf.mxu0
        %v1287 = vpop.f32.mrf.mxu0
        %v1288 = vadd.f32 %v1195, %v1287
        %v1289 = vpop.f32.mrf.mxu0
        %1290 = vmatprep.mubr.bf16.mxu0 0
        %1291 = vmatmul.mubr.bf16.gmra.mxu0 %v1236
        %v1292 = vpop.f32.mrf.mxu0
        %v1293 = vadd.f32 %v1195, %v1292
        %v1294 = vpop.f32.mrf.mxu0
        %v1295 = vpop.f32.mrf.mxu0
        %v1296 = vadd.f32 %v1195, %v1295
        %v1297 = vpop.f32.mrf.mxu0
        %1298 = vmatprep.mubr.bf16.mxu0 0
        %1299 = vmatmul.mubr.bf16.gmra.mxu0 %v1238
        %v1300 = vpop.f32.mrf.mxu0
        %v1301 = vadd.f32 %v1195, %v1300
        %v1302 = vpop.f32.mrf.mxu0
        %v1303 = vpop.f32.mrf.mxu0
        %v1304 = vadd.f32 %v1195, %v1303
        %v1305 = vpop.f32.mrf.mxu0
        %1306 = vmatprep.mubr.bf16.mxu0 0
        %1307 = vmatmul.mubr.bf16.gmra.mxu0 %v1240
        %v1308 = vpop.f32.mrf.mxu0
        %v1309 = vadd.f32 %v1195, %v1308
        %v1310 = vpop.f32.mrf.mxu0
        %v1311 = vpop.f32.mrf.mxu0
        %v1312 = vadd.f32 %v1195, %v1311
        %v1313 = vpop.f32.mrf.mxu0
        %1314 = vmatprep.mubr.bf16.mxu0 0
        %1315 = vmatmul.mubr.bf16.gmra.mxu0 %v1242
        %v1316 = vpop.f32.mrf.mxu0
        %v1317 = vadd.f32 %v1195, %v1316
        %v1318 = vpop.f32.mrf.mxu0
        %v1319 = vpop.f32.mrf.mxu0
        %v1320 = vadd.f32 %v1195, %v1319
        %v1321 = vpop.f32.mrf.mxu0
        %1322 = vmatprep.mubr.bf16.mxu0 0
        %1323 = vmatmul.mubr.bf16.gmra.mxu0 %v1244
        %v1324 = vpop.f32.mrf.mxu0
        %v1325 = vadd.f32 %v1195, %v1324
        %v1326 = vpop.f32.mrf.mxu0
        %v1327 = vpop.f32.mrf.mxu0
        %v1328 = vadd.f32 %v1195, %v1327
        %v1329 = vpop.f32.mrf.mxu0
        %1330 = vmatprep.mubr.bf16.mxu0 0
        %1331 = vmatmul.mubr.bf16.gmra.mxu0 %v1246
        %v1332 = vpop.f32.mrf.mxu0
        %v1333 = vadd.f32 %v1195, %v1332
        %v1334 = vpop.f32.mrf.mxu0
        %v1335 = vpop.f32.mrf.mxu0
        %v1336 = vadd.f32 %v1195, %v1335
        %v1337 = vpop.f32.mrf.mxu0
        %1338 = vmatprep.mubr.bf16.mxu0 0
        %1339 = vmatmul.mubr.bf16.gmra.mxu0 %v1248
        %v1340 = vpop.f32.mrf.mxu0
        %v1341 = vadd.f32 %v1195, %v1340
        %v1342 = vpop.f32.mrf.mxu0
        %v1343 = vpop.f32.mrf.mxu0
        %v1344 = vadd.f32 %v1195, %v1343
        %v1345 = vpop.f32.mrf.mxu0
        %1346 = vdwg.mxu0
        %v1347 = vmul.f32 %v1285, %v1285
        %v1348 = vmul.f32 %v1288, %v1288
        %v1349 = vmul.f32 %v1293, %v1293
        %v1350 = vmul.f32 %v1296, %v1296
        %v1351 = vmul.f32 %v1301, %v1301
        %v1352 = vmul.f32 %v1304, %v1304
        %v1353 = vmul.f32 %v1309, %v1309
        %v1354 = vmul.f32 %v1312, %v1312
        %v1355 = vmul.f32 %v1317, %v1317
        %v1356 = vmul.f32 %v1320, %v1320
        %v1357 = vmul.f32 %v1325, %v1325
        %v1358 = vmul.f32 %v1328, %v1328
        %v1359 = vmul.f32 %v1333, %v1333
        %v1360 = vmul.f32 %v1336, %v1336
        %v1361 = vmul.f32 %v1341, %v1341
        %v1362 = vmul.f32 %v1344, %v1344
        %v1363 = vmul.f32 %v1285, %v1347
        %v1364 = vmul.f32 %v1288, %v1348
        %v1365 = vmul.f32 %v1293, %v1349
        %v1366 = vmul.f32 %v1296, %v1350
        %v1367 = vmul.f32 %v1301, %v1351
        %v1368 = vmul.f32 %v1304, %v1352
        %v1369 = vmul.f32 %v1309, %v1353
        %v1370 = vmul.f32 %v1312, %v1354
        %v1371 = vmul.f32 %v1317, %v1355
        %v1372 = vmul.f32 %v1320, %v1356
        %v1373 = vmul.f32 %v1325, %v1357
        %v1374 = vmul.f32 %v1328, %v1358
        %v1375 = vmul.f32 %v1333, %v1359
        %v1376 = vmul.f32 %v1336, %v1360
        %v1377 = vmul.f32 %v1341, %v1361
        %v1378 = vmul.f32 %v1344, %v1362
        %v1379 = vmul.f32 %v1363, 0.044715
        %v1380 = vmul.f32 %v1364, 0.044715
        %v1381 = vmul.f32 %v1365, 0.044715
        %v1382 = vmul.f32 %v1366, 0.044715
        %v1383 = vmul.f32 %v1367, 0.044715
        %v1384 = vmul.f32 %v1368, 0.044715
        %v1385 = vmul.f32 %v1369, 0.044715
        %v1386 = vmul.f32 %v1370, 0.044715
        %v1387 = vmul.f32 %v1371, 0.044715
        %v1388 = vmul.f32 %v1372, 0.044715
        %v1389 = vmul.f32 %v1373, 0.044715
        %v1390 = vmul.f32 %v1374, 0.044715
        %v1391 = vmul.f32 %v1375, 0.044715
        %v1392 = vmul.f32 %v1376, 0.044715
        %v1393 = vmul.f32 %v1377, 0.044715
        %v1394 = vmul.f32 %v1378, 0.044715
        %v1395 = vadd.f32 %v1285, %v1379
        %v1396 = vadd.f32 %v1288, %v1380
        %v1397 = vadd.f32 %v1293, %v1381
        %v1398 = vadd.f32 %v1296, %v1382
        %v1399 = vadd.f32 %v1301, %v1383
        %v1400 = vadd.f32 %v1304, %v1384
        %v1401 = vadd.f32 %v1309, %v1385
        %v1402 = vadd.f32 %v1312, %v1386
        %v1403 = vadd.f32 %v1317, %v1387
        %v1404 = vadd.f32 %v1320, %v1388
        %v1405 = vadd.f32 %v1325, %v1389
        %v1406 = vadd.f32 %v1328, %v1390
        %v1407 = vadd.f32 %v1333, %v1391
        %v1408 = vadd.f32 %v1336, %v1392
        %v1409 = vadd.f32 %v1341, %v1393
        %v1410 = vadd.f32 %v1344, %v1394
        %v1411 = vmul.f32 %v1395, 0.7978846
        %v1412 = vmul.f32 %v1396, 0.7978846
        %v1413 = vmul.f32 %v1397, 0.7978846
        %v1414 = vmul.f32 %v1398, 0.7978846
        %v1415 = vmul.f32 %v1399, 0.7978846
        %v1416 = vmul.f32 %v1400, 0.7978846
        %v1417 = vmul.f32 %v1401, 0.7978846
        %v1418 = vmul.f32 %v1402, 0.7978846
        %v1419 = vmul.f32 %v1403, 0.7978846
        %v1420 = vmul.f32 %v1404, 0.7978846
        %v1421 = vmul.f32 %v1405, 0.7978846
        %v1422 = vmul.f32 %v1406, 0.7978846
        %v1423 = vmul.f32 %v1407, 0.7978846
        %v1424 = vmul.f32 %v1408, 0.7978846
        %v1425 = vmul.f32 %v1409, 0.7978846
        %v1426 = vmul.f32 %v1410, 0.7978846
        %v1427 = vtanh.pop %v1411
        %v1428 = vtanh.pop %v1412
        %v1429 = vtanh.pop %v1413
        %v1430 = vtanh.pop %v1414
        %v1431 = vtanh.pop %v1415
        %v1432 = vtanh.pop %v1416
        %v1433 = vtanh.pop %v1417
        %v1434 = vtanh.pop %v1418
        %v1435 = vtanh.pop %v1419
        %v1436 = vtanh.pop %v1420
        %v1437 = vtanh.pop %v1421
        %v1438 = vtanh.pop %v1422
        %v1439 = vtanh.pop %v1423
        %v1440 = vtanh.pop %v1424
        %v1441 = vtanh.pop %v1425
        %v1442 = vtanh.pop %v1426
        %v1443 = vadd.f32 %v1427, 1.0
        %v1444 = vadd.f32 %v1428, 1.0
        %v1445 = vadd.f32 %v1429, 1.0
        %v1446 = vadd.f32 %v1430, 1.0
        %v1447 = vadd.f32 %v1431, 1.0
        %v1448 = vadd.f32 %v1432, 1.0
        %v1449 = vadd.f32 %v1433, 1.0
        %v1450 = vadd.f32 %v1434, 1.0
        %v1451 = vadd.f32 %v1435, 1.0
        %v1452 = vadd.f32 %v1436, 1.0
        %v1453 = vadd.f32 %v1437, 1.0
        %v1454 = vadd.f32 %v1438, 1.0
        %v1455 = vadd.f32 %v1439, 1.0
        %v1456 = vadd.f32 %v1440, 1.0
        %v1457 = vadd.f32 %v1441, 1.0
        %v1458 = vadd.f32 %v1442, 1.0
        %v1459 = vmul.f32 %v1443, 0.5
        %v1460 = vmul.f32 %v1444, 0.5
        %v1461 = vmul.f32 %v1445, 0.5
        %v1462 = vmul.f32 %v1446, 0.5
        %v1463 = vmul.f32 %v1447, 0.5
        %v1464 = vmul.f32 %v1448, 0.5
        %v1465 = vmul.f32 %v1449, 0.5
        %v1466 = vmul.f32 %v1450, 0.5
        %v1467 = vmul.f32 %v1451, 0.5
        %v1468 = vmul.f32 %v1452, 0.5
        %v1469 = vmul.f32 %v1453, 0.5
        %v1470 = vmul.f32 %v1454, 0.5
        %v1471 = vmul.f32 %v1455, 0.5
        %v1472 = vmul.f32 %v1456, 0.5
        %v1473 = vmul.f32 %v1457, 0.5
        %v1474 = vmul.f32 %v1458, 0.5
        %v1475 = vmul.f32 %v1285, %v1459
        %v1476 = vmul.f32 %v1288, %v1460
        %v1477 = vmul.f32 %v1293, %v1461
        %v1478 = vmul.f32 %v1296, %v1462
        %v1479 = vmul.f32 %v1301, %v1463
        %v1480 = vmul.f32 %v1304, %v1464
        %v1481 = vmul.f32 %v1309, %v1465
        %v1482 = vmul.f32 %v1312, %v1466
        %v1483 = vmul.f32 %v1317, %v1467
        %v1484 = vmul.f32 %v1320, %v1468
        %v1485 = vmul.f32 %v1325, %v1469
        %v1486 = vmul.f32 %v1328, %v1470
        %v1487 = vmul.f32 %v1333, %v1471
        %v1488 = vmul.f32 %v1336, %v1472
        %v1489 = vmul.f32 %v1341, %v1473
        %v1490 = vmul.f32 %v1344, %v1474
        %vm1491 = vcmp.gt.f32.partialorder %v360, 0.5
        %vm1492 = vcmp.gt.f32.partialorder %v361, 0.5
        %vm1493 = vcmp.gt.f32.partialorder %v362, 0.5
        %vm1494 = vcmp.gt.f32.partialorder %v363, 0.5
        %vm1495 = vcmp.gt.f32.partialorder %v364, 0.5
        %vm1496 = vcmp.gt.f32.partialorder %v365, 0.5
        %vm1497 = vcmp.gt.f32.partialorder %v366, 0.5
        %vm1498 = vcmp.gt.f32.partialorder %v367, 0.5
        %vm1499 = vcmp.gt.f32.partialorder %v368, 0.5
        %vm1500 = vcmp.gt.f32.partialorder %v369, 0.5
        %vm1501 = vcmp.gt.f32.partialorder %v370, 0.5
        %vm1502 = vcmp.gt.f32.partialorder %v371, 0.5
        %vm1503 = vcmp.gt.f32.partialorder %v372, 0.5
        %vm1504 = vcmp.gt.f32.partialorder %v373, 0.5
        %vm1505 = vcmp.gt.f32.partialorder %v374, 0.5
        %vm1506 = vcmp.gt.f32.partialorder %v375, 0.5
        %v1507 = vsel %vm1491, 1, 0
        %v1508 = vsel %vm1492, 1, 0
        %v1509 = vsel %vm1493, 1, 0
        %v1510 = vsel %vm1494, 1, 0
        %v1511 = vsel %vm1495, 1, 0
        %v1512 = vsel %vm1496, 1, 0
        %v1513 = vsel %vm1497, 1, 0
        %v1514 = vsel %vm1498, 1, 0
        %v1515 = vsel %vm1499, 1, 0
        %v1516 = vsel %vm1500, 1, 0
        %v1517 = vsel %vm1501, 1, 0
        %v1518 = vsel %vm1502, 1, 0
        %v1519 = vsel %vm1503, 1, 0
        %v1520 = vsel %vm1504, 1, 0
        %v1521 = vsel %vm1505, 1, 0
        %v1522 = vsel %vm1506, 1, 0
        %1523 = vset.pattern.permute.xlu0 0
        %1524 = vperm.xlu0 %1523, %v1507
        %v1525 = vpop.permute.xlu0 %1524
        %1526 = vset.pattern.permute.xlu0 0
        %1527 = vperm.xlu0 %1526, %v1508
        %v1528 = vpop.permute.xlu0 %1527
        %1529 = vset.pattern.permute.xlu0 0
        %1530 = vperm.xlu0 %1529, %v1509
        %v1531 = vpop.permute.xlu0 %1530
        %1532 = vset.pattern.permute.xlu0 0
        %1533 = vperm.xlu0 %1532, %v1510
        %v1534 = vpop.permute.xlu0 %1533
        %1535 = vset.pattern.permute.xlu0 0
        %1536 = vperm.xlu0 %1535, %v1511
        %v1537 = vpop.permute.xlu0 %1536
        %1538 = vset.pattern.permute.xlu0 0
        %1539 = vperm.xlu0 %1538, %v1512
        %v1540 = vpop.permute.xlu0 %1539
        %1541 = vset.pattern.permute.xlu0 0
        %1542 = vperm.xlu0 %1541, %v1513
        %v1543 = vpop.permute.xlu0 %1542
        %1544 = vset.pattern.permute.xlu0 0
        %1545 = vperm.xlu0 %1544, %v1514
        %v1546 = vpop.permute.xlu0 %1545
        %1547 = vset.pattern.permute.xlu0 0
        %1548 = vperm.xlu0 %1547, %v1515
        %v1549 = vpop.permute.xlu0 %1548
        %1550 = vset.pattern.permute.xlu0 0
        %1551 = vperm.xlu0 %1550, %v1516
        %v1552 = vpop.permute.xlu0 %1551
        %1553 = vset.pattern.permute.xlu0 0
        %1554 = vperm.xlu0 %1553, %v1517
        %v1555 = vpop.permute.xlu0 %1554
        %1556 = vset.pattern.permute.xlu0 0
        %1557 = vperm.xlu0 %1556, %v1518
        %v1558 = vpop.permute.xlu0 %1557
        %1559 = vset.pattern.permute.xlu0 0
        %1560 = vperm.xlu0 %1559, %v1519
        %v1561 = vpop.permute.xlu0 %1560
        %1562 = vset.pattern.permute.xlu0 0
        %1563 = vperm.xlu0 %1562, %v1520
        %v1564 = vpop.permute.xlu0 %1563
        %1565 = vset.pattern.permute.xlu0 0
        %1566 = vperm.xlu0 %1565, %v1521
        %v1567 = vpop.permute.xlu0 %1566
        %1568 = vset.pattern.permute.xlu0 0
        %1569 = vperm.xlu0 %1568, %v1522
        %v1570 = vpop.permute.xlu0 %1569
        %vm1571 = vcmp.eq.s32.totalorder %v1525, 1
        %vm1572 = vcmp.eq.s32.totalorder %v1528, 1
        %vm1573 = vcmp.eq.s32.totalorder %v1531, 1
        %vm1574 = vcmp.eq.s32.totalorder %v1534, 1
        %vm1575 = vcmp.eq.s32.totalorder %v1537, 1
        %vm1576 = vcmp.eq.s32.totalorder %v1540, 1
        %vm1577 = vcmp.eq.s32.totalorder %v1543, 1
        %vm1578 = vcmp.eq.s32.totalorder %v1546, 1
        %vm1579 = vcmp.eq.s32.totalorder %v1549, 1
        %vm1580 = vcmp.eq.s32.totalorder %v1552, 1
        %vm1581 = vcmp.eq.s32.totalorder %v1555, 1
        %vm1582 = vcmp.eq.s32.totalorder %v1558, 1
        %vm1583 = vcmp.eq.s32.totalorder %v1561, 1
        %vm1584 = vcmp.eq.s32.totalorder %v1564, 1
        %vm1585 = vcmp.eq.s32.totalorder %v1567, 1
        %vm1586 = vcmp.eq.s32.totalorder %v1570, 1
        %v1587 = vsel %vm1571, %v1475, -1e+09
        %v1588 = vsel %vm1572, %v1476, -1e+09
        %v1589 = vsel %vm1573, %v1477, -1e+09
        %v1590 = vsel %vm1574, %v1478, -1e+09
        %v1591 = vsel %vm1575, %v1479, -1e+09
        %v1592 = vsel %vm1576, %v1480, -1e+09
        %v1593 = vsel %vm1577, %v1481, -1e+09
        %v1594 = vsel %vm1578, %v1482, -1e+09
        %v1595 = vsel %vm1579, %v1483, -1e+09
        %v1596 = vsel %vm1580, %v1484, -1e+09
        %v1597 = vsel %vm1581, %v1485, -1e+09
        %v1598 = vsel %vm1582, %v1486, -1e+09
        %v1599 = vsel %vm1583, %v1487, -1e+09
        %v1600 = vsel %vm1584, %v1488, -1e+09
        %v1601 = vsel %vm1585, %v1489, -1e+09
        %v1602 = vsel %vm1586, %v1490, -1e+09
        %v1619 = vcombine.high %v1587, %v1587
        %v1620 = vcombine.high %v1588, %v1588
        %v1621 = vcombine.high %v1589, %v1589
        %v1622 = vcombine.high %v1590, %v1590
        %v1623 = vcombine.high %v1591, %v1591
        %v1624 = vcombine.high %v1592, %v1592
        %v1625 = vcombine.high %v1593, %v1593
        %v1626 = vcombine.high %v1594, %v1594
        %v1627 = vcombine.high %v1595, %v1595
        %v1628 = vcombine.high %v1596, %v1596
        %v1629 = vcombine.high %v1597, %v1597
        %v1630 = vcombine.high %v1598, %v1598
        %v1631 = vcombine.high %v1599, %v1599
        %v1632 = vcombine.high %v1600, %v1600
        %v1633 = vcombine.high %v1601, %v1601
        %v1634 = vcombine.high %v1602, %v1602
        %vm1651 = vcmask 519168
        %v1652 = vsel %vm1651, %v1587, -inf
        %v1653 = vrot.slane %v1652, 4
        %v1654 = vmax.f32 %v1652, %v1653
        %v1655 = vrot.slane %v1654, 2
        %v1656 = vmax.f32 %v1654, %v1655
        %v1657 = vrot.slane %v1656, 1
        %v1658 = vmax.f32 %v1656, %v1657
        %v1659 = vsel %vm1651, %v1619, -inf
        %v1660 = vrot.slane %v1659, 4
        %v1661 = vmax.f32 %v1659, %v1660
        %v1662 = vrot.slane %v1661, 2
        %v1663 = vmax.f32 %v1661, %v1662
        %v1664 = vrot.slane %v1663, 1
        %v1665 = vmax.f32 %v1663, %v1664
        %v1666 = vsel %vm1651, %v1588, -inf
        %v1667 = vrot.slane %v1666, 4
        %v1668 = vmax.f32 %v1666, %v1667
        %v1669 = vrot.slane %v1668, 2
        %v1670 = vmax.f32 %v1668, %v1669
        %v1671 = vrot.slane %v1670, 1
        %v1672 = vmax.f32 %v1670, %v1671
        %v1673 = vsel %vm1651, %v1620, -inf
        %v1674 = vrot.slane %v1673, 4
        %v1675 = vmax.f32 %v1673, %v1674
        %v1676 = vrot.slane %v1675, 2
        %v1677 = vmax.f32 %v1675, %v1676
        %v1678 = vrot.slane %v1677, 1
        %v1679 = vmax.f32 %v1677, %v1678
        %v1680 = vsel %vm1651, %v1589, -inf
        %v1681 = vrot.slane %v1680, 4
        %v1682 = vmax.f32 %v1680, %v1681
        %v1683 = vrot.slane %v1682, 2
        %v1684 = vmax.f32 %v1682, %v1683
        %v1685 = vrot.slane %v1684, 1
        %v1686 = vmax.f32 %v1684, %v1685
        %v1687 = vsel %vm1651, %v1621, -inf
        %v1688 = vrot.slane %v1687, 4
        %v1689 = vmax.f32 %v1687, %v1688
        %v1690 = vrot.slane %v1689, 2
        %v1691 = vmax.f32 %v1689, %v1690
        %v1692 = vrot.slane %v1691, 1
        %v1693 = vmax.f32 %v1691, %v1692
        %v1694 = vsel %vm1651, %v1590, -inf
        %v1695 = vrot.slane %v1694, 4
        %v1696 = vmax.f32 %v1694, %v1695
        %v1697 = vrot.slane %v1696, 2
        %v1698 = vmax.f32 %v1696, %v1697
        %v1699 = vrot.slane %v1698, 1
        %v1700 = vmax.f32 %v1698, %v1699
        %v1701 = vsel %vm1651, %v1622, -inf
        %v1702 = vrot.slane %v1701, 4
        %v1703 = vmax.f32 %v1701, %v1702
        %v1704 = vrot.slane %v1703, 2
        %v1705 = vmax.f32 %v1703, %v1704
        %v1706 = vrot.slane %v1705, 1
        %v1707 = vmax.f32 %v1705, %v1706
        %v1708 = vsel %vm1651, %v1591, -inf
        %v1709 = vrot.slane %v1708, 4
        %v1710 = vmax.f32 %v1708, %v1709
        %v1711 = vrot.slane %v1710, 2
        %v1712 = vmax.f32 %v1710, %v1711
        %v1713 = vrot.slane %v1712, 1
        %v1714 = vmax.f32 %v1712, %v1713
        %v1715 = vsel %vm1651, %v1623, -inf
        %v1716 = vrot.slane %v1715, 4
        %v1717 = vmax.f32 %v1715, %v1716
        %v1718 = vrot.slane %v1717, 2
        %v1719 = vmax.f32 %v1717, %v1718
        %v1720 = vrot.slane %v1719, 1
        %v1721 = vmax.f32 %v1719, %v1720
        %v1722 = vsel %vm1651, %v1592, -inf
        %v1723 = vrot.slane %v1722, 4
        %v1724 = vmax.f32 %v1722, %v1723
        %v1725 = vrot.slane %v1724, 2
        %v1726 = vmax.f32 %v1724, %v1725
        %v1727 = vrot.slane %v1726, 1
        %v1728 = vmax.f32 %v1726, %v1727
        %v1729 = vsel %vm1651, %v1624, -inf
        %v1730 = vrot.slane %v1729, 4
        %v1731 = vmax.f32 %v1729, %v1730
        %v1732 = vrot.slane %v1731, 2
        %v1733 = vmax.f32 %v1731, %v1732
        %v1734 = vrot.slane %v1733, 1
        %v1735 = vmax.f32 %v1733, %v1734
        %v1736 = vsel %vm1651, %v1593, -inf
        %v1737 = vrot.slane %v1736, 4
        %v1738 = vmax.f32 %v1736, %v1737
        %v1739 = vrot.slane %v1738, 2
        %v1740 = vmax.f32 %v1738, %v1739
        %v1741 = vrot.slane %v1740, 1
        %v1742 = vmax.f32 %v1740, %v1741
        %v1743 = vsel %vm1651, %v1625, -inf
        %v1744 = vrot.slane %v1743, 4
        %v1745 = vmax.f32 %v1743, %v1744
        %v1746 = vrot.slane %v1745, 2
        %v1747 = vmax.f32 %v1745, %v1746
        %v1748 = vrot.slane %v1747, 1
        %v1749 = vmax.f32 %v1747, %v1748
        %v1750 = vsel %vm1651, %v1594, -inf
        %v1751 = vrot.slane %v1750, 4
        %v1752 = vmax.f32 %v1750, %v1751
        %v1753 = vrot.slane %v1752, 2
        %v1754 = vmax.f32 %v1752, %v1753
        %v1755 = vrot.slane %v1754, 1
        %v1756 = vmax.f32 %v1754, %v1755
        %v1757 = vsel %vm1651, %v1626, -inf
        %v1758 = vrot.slane %v1757, 4
        %v1759 = vmax.f32 %v1757, %v1758
        %v1760 = vrot.slane %v1759, 2
        %v1761 = vmax.f32 %v1759, %v1760
        %v1762 = vrot.slane %v1761, 1
        %v1763 = vmax.f32 %v1761, %v1762
        %v1764 = vsel %vm1651, %v1595, -inf
        %v1765 = vrot.slane %v1764, 4
        %v1766 = vmax.f32 %v1764, %v1765
        %v1767 = vrot.slane %v1766, 2
        %v1768 = vmax.f32 %v1766, %v1767
        %v1769 = vrot.slane %v1768, 1
        %v1770 = vmax.f32 %v1768, %v1769
        %v1771 = vsel %vm1651, %v1627, -inf
        %v1772 = vrot.slane %v1771, 4
        %v1773 = vmax.f32 %v1771, %v1772
        %v1774 = vrot.slane %v1773, 2
        %v1775 = vmax.f32 %v1773, %v1774
        %v1776 = vrot.slane %v1775, 1
        %v1777 = vmax.f32 %v1775, %v1776
        %v1778 = vsel %vm1651, %v1596, -inf
        %v1779 = vrot.slane %v1778, 4
        %v1780 = vmax.f32 %v1778, %v1779
        %v1781 = vrot.slane %v1780, 2
        %v1782 = vmax.f32 %v1780, %v1781
        %v1783 = vrot.slane %v1782, 1
        %v1784 = vmax.f32 %v1782, %v1783
        %v1785 = vsel %vm1651, %v1628, -inf
        %v1786 = vrot.slane %v1785, 4
        %v1787 = vmax.f32 %v1785, %v1786
        %v1788 = vrot.slane %v1787, 2
        %v1789 = vmax.f32 %v1787, %v1788
        %v1790 = vrot.slane %v1789, 1
        %v1791 = vmax.f32 %v1789, %v1790
        %v1792 = vsel %vm1651, %v1597, -inf
        %v1793 = vrot.slane %v1792, 4
        %v1794 = vmax.f32 %v1792, %v1793
        %v1795 = vrot.slane %v1794, 2
        %v1796 = vmax.f32 %v1794, %v1795
        %v1797 = vrot.slane %v1796, 1
        %v1798 = vmax.f32 %v1796, %v1797
        %v1799 = vsel %vm1651, %v1629, -inf
        %v1800 = vrot.slane %v1799, 4
        %v1801 = vmax.f32 %v1799, %v1800
        %v1802 = vrot.slane %v1801, 2
        %v1803 = vmax.f32 %v1801, %v1802
        %v1804 = vrot.slane %v1803, 1
        %v1805 = vmax.f32 %v1803, %v1804
        %v1806 = vsel %vm1651, %v1598, -inf
        %v1807 = vrot.slane %v1806, 4
        %v1808 = vmax.f32 %v1806, %v1807
        %v1809 = vrot.slane %v1808, 2
        %v1810 = vmax.f32 %v1808, %v1809
        %v1811 = vrot.slane %v1810, 1
        %v1812 = vmax.f32 %v1810, %v1811
        %v1813 = vsel %vm1651, %v1630, -inf
        %v1814 = vrot.slane %v1813, 4
        %v1815 = vmax.f32 %v1813, %v1814
        %v1816 = vrot.slane %v1815, 2
        %v1817 = vmax.f32 %v1815, %v1816
        %v1818 = vrot.slane %v1817, 1
        %v1819 = vmax.f32 %v1817, %v1818
        %v1820 = vsel %vm1651, %v1599, -inf
        %v1821 = vrot.slane %v1820, 4
        %v1822 = vmax.f32 %v1820, %v1821
        %v1823 = vrot.slane %v1822, 2
        %v1824 = vmax.f32 %v1822, %v1823
        %v1825 = vrot.slane %v1824, 1
        %v1826 = vmax.f32 %v1824, %v1825
        %v1827 = vsel %vm1651, %v1631, -inf
        %v1828 = vrot.slane %v1827, 4
        %v1829 = vmax.f32 %v1827, %v1828
        %v1830 = vrot.slane %v1829, 2
        %v1831 = vmax.f32 %v1829, %v1830
        %v1832 = vrot.slane %v1831, 1
        %v1833 = vmax.f32 %v1831, %v1832
        %v1834 = vsel %vm1651, %v1600, -inf
        %v1835 = vrot.slane %v1834, 4
        %v1836 = vmax.f32 %v1834, %v1835
        %v1837 = vrot.slane %v1836, 2
        %v1838 = vmax.f32 %v1836, %v1837
        %v1839 = vrot.slane %v1838, 1
        %v1840 = vmax.f32 %v1838, %v1839
        %v1841 = vsel %vm1651, %v1632, -inf
        %v1842 = vrot.slane %v1841, 4
        %v1843 = vmax.f32 %v1841, %v1842
        %v1844 = vrot.slane %v1843, 2
        %v1845 = vmax.f32 %v1843, %v1844
        %v1846 = vrot.slane %v1845, 1
        %v1847 = vmax.f32 %v1845, %v1846
        %v1848 = vsel %vm1651, %v1601, -inf
        %v1849 = vrot.slane %v1848, 4
        %v1850 = vmax.f32 %v1848, %v1849
        %v1851 = vrot.slane %v1850, 2
        %v1852 = vmax.f32 %v1850, %v1851
        %v1853 = vrot.slane %v1852, 1
        %v1854 = vmax.f32 %v1852, %v1853
        %v1855 = vsel %vm1651, %v1633, -inf
        %v1856 = vrot.slane %v1855, 4
        %v1857 = vmax.f32 %v1855, %v1856
        %v1858 = vrot.slane %v1857, 2
        %v1859 = vmax.f32 %v1857, %v1858
        %v1860 = vrot.slane %v1859, 1
        %v1861 = vmax.f32 %v1859, %v1860
        %v1862 = vsel %vm1651, %v1602, -inf
        %v1863 = vrot.slane %v1862, 4
        %v1864 = vmax.f32 %v1862, %v1863
        %v1865 = vrot.slane %v1864, 2
        %v1866 = vmax.f32 %v1864, %v1865
        %v1867 = vrot.slane %v1866, 1
        %v1868 = vmax.f32 %v1866, %v1867
        %v1869 = vsel %vm1651, %v1634, -inf
        %v1870 = vrot.slane %v1869, 4
        %v1871 = vmax.f32 %v1869, %v1870
        %v1872 = vrot.slane %v1871, 2
        %v1873 = vmax.f32 %v1871, %v1872
        %v1874 = vrot.slane %v1873, 1
        %v1875 = vmax.f32 %v1873, %v1874
        %v1876 = vcombine.high %v360, %v360
        %v1877 = vcombine.high %v361, %v361
        %v1878 = vcombine.high %v362, %v362
        %v1879 = vcombine.high %v363, %v363
        %v1880 = vcombine.high %v364, %v364
        %v1881 = vcombine.high %v365, %v365
        %v1882 = vcombine.high %v366, %v366
        %v1883 = vcombine.high %v367, %v367
        %v1884 = vcombine.high %v368, %v368
        %v1885 = vcombine.high %v369, %v369
        %v1886 = vcombine.high %v370, %v370
        %v1887 = vcombine.high %v371, %v371
        %v1888 = vcombine.high %v372, %v372
        %v1889 = vcombine.high %v373, %v373
        %v1890 = vcombine.high %v374, %v374
        %v1891 = vcombine.high %v375, %v375
        %vm1908 = vcmask 3072
        %v1909 = vsel %vm1908, %v360, -inf
        %v1910 = vrot.slane %v1909, 4
        %v1911 = vmax.f32 %v1909, %v1910
        %v1912 = vrot.slane %v1911, 2
        %v1913 = vmax.f32 %v1911, %v1912
        %v1914 = vrot.slane %v1913, 1
        %v1915 = vmax.f32 %v1913, %v1914
        %v1916 = vsel %vm1908, %v1876, -inf
        %v1917 = vrot.slane %v1916, 4
        %v1918 = vmax.f32 %v1916, %v1917
        %v1919 = vrot.slane %v1918, 2
        %v1920 = vmax.f32 %v1918, %v1919
        %v1921 = vrot.slane %v1920, 1
        %v1922 = vmax.f32 %v1920, %v1921
        %v1923 = vsel %vm1908, %v361, -inf
        %v1924 = vrot.slane %v1923, 4
        %v1925 = vmax.f32 %v1923, %v1924
        %v1926 = vrot.slane %v1925, 2
        %v1927 = vmax.f32 %v1925, %v1926
        %v1928 = vrot.slane %v1927, 1
        %v1929 = vmax.f32 %v1927, %v1928
        %v1930 = vsel %vm1908, %v1877, -inf
        %v1931 = vrot.slane %v1930, 4
        %v1932 = vmax.f32 %v1930, %v1931
        %v1933 = vrot.slane %v1932, 2
        %v1934 = vmax.f32 %v1932, %v1933
        %v1935 = vrot.slane %v1934, 1
        %v1936 = vmax.f32 %v1934, %v1935
        %v1937 = vsel %vm1908, %v362, -inf
        %v1938 = vrot.slane %v1937, 4
        %v1939 = vmax.f32 %v1937, %v1938
        %v1940 = vrot.slane %v1939, 2
        %v1941 = vmax.f32 %v1939, %v1940
        %v1942 = vrot.slane %v1941, 1
        %v1943 = vmax.f32 %v1941, %v1942
        %v1944 = vsel %vm1908, %v1878, -inf
        %v1945 = vrot.slane %v1944, 4
        %v1946 = vmax.f32 %v1944, %v1945
        %v1947 = vrot.slane %v1946, 2
        %v1948 = vmax.f32 %v1946, %v1947
        %v1949 = vrot.slane %v1948, 1
        %v1950 = vmax.f32 %v1948, %v1949
        %v1951 = vsel %vm1908, %v363, -inf
        %v1952 = vrot.slane %v1951, 4
        %v1953 = vmax.f32 %v1951, %v1952
        %v1954 = vrot.slane %v1953, 2
        %v1955 = vmax.f32 %v1953, %v1954
        %v1956 = vrot.slane %v1955, 1
        %v1957 = vmax.f32 %v1955, %v1956
        %v1958 = vsel %vm1908, %v1879, -inf
        %v1959 = vrot.slane %v1958, 4
        %v1960 = vmax.f32 %v1958, %v1959
        %v1961 = vrot.slane %v1960, 2
        %v1962 = vmax.f32 %v1960, %v1961
        %v1963 = vrot.slane %v1962, 1
        %v1964 = vmax.f32 %v1962, %v1963
        %v1965 = vsel %vm1908, %v364, -inf
        %v1966 = vrot.slane %v1965, 4
        %v1967 = vmax.f32 %v1965, %v1966
        %v1968 = vrot.slane %v1967, 2
        %v1969 = vmax.f32 %v1967, %v1968
        %v1970 = vrot.slane %v1969, 1
        %v1971 = vmax.f32 %v1969, %v1970
        %v1972 = vsel %vm1908, %v1880, -inf
        %v1973 = vrot.slane %v1972, 4
        %v1974 = vmax.f32 %v1972, %v1973
        %v1975 = vrot.slane %v1974, 2
        %v1976 = vmax.f32 %v1974, %v1975
        %v1977 = vrot.slane %v1976, 1
        %v1978 = vmax.f32 %v1976, %v1977
        %v1979 = vsel %vm1908, %v365, -inf
        %v1980 = vrot.slane %v1979, 4
        %v1981 = vmax.f32 %v1979, %v1980
        %v1982 = vrot.slane %v1981, 2
        %v1983 = vmax.f32 %v1981, %v1982
        %v1984 = vrot.slane %v1983, 1
        %v1985 = vmax.f32 %v1983, %v1984
        %v1986 = vsel %vm1908, %v1881, -inf
        %v1987 = vrot.slane %v1986, 4
        %v1988 = vmax.f32 %v1986, %v1987
        %v1989 = vrot.slane %v1988, 2
        %v1990 = vmax.f32 %v1988, %v1989
        %v1991 = vrot.slane %v1990, 1
        %v1992 = vmax.f32 %v1990, %v1991
        %v1993 = vsel %vm1908, %v366, -inf
        %v1994 = vrot.slane %v1993, 4
        %v1995 = vmax.f32 %v1993, %v1994
        %v1996 = vrot.slane %v1995, 2
        %v1997 = vmax.f32 %v1995, %v1996
        %v1998 = vrot.slane %v1997, 1
        %v1999 = vmax.f32 %v1997, %v1998
        %v2000 = vsel %vm1908, %v1882, -inf
        %v2001 = vrot.slane %v2000, 4
        %v2002 = vmax.f32 %v2000, %v2001
        %v2003 = vrot.slane %v2002, 2
        %v2004 = vmax.f32 %v2002, %v2003
        %v2005 = vrot.slane %v2004, 1
        %v2006 = vmax.f32 %v2004, %v2005
        %v2007 = vsel %vm1908, %v367, -inf
        %v2008 = vrot.slane %v2007, 4
        %v2009 = vmax.f32 %v2007, %v2008
        %v2010 = vrot.slane %v2009, 2
        %v2011 = vmax.f32 %v2009, %v2010
        %v2012 = vrot.slane %v2011, 1
        %v2013 = vmax.f32 %v2011, %v2012
        %v2014 = vsel %vm1908, %v1883, -inf
        %v2015 = vrot.slane %v2014, 4
        %v2016 = vmax.f32 %v2014, %v2015
        %v2017 = vrot.slane %v2016, 2
        %v2018 = vmax.f32 %v2016, %v2017
        %v2019 = vrot.slane %v2018, 1
        %v2020 = vmax.f32 %v2018, %v2019
        %v2021 = vsel %vm1908, %v368, -inf
        %v2022 = vrot.slane %v2021, 4
        %v2023 = vmax.f32 %v2021, %v2022
        %v2024 = vrot.slane %v2023, 2
        %v2025 = vmax.f32 %v2023, %v2024
        %v2026 = vrot.slane %v2025, 1
        %v2027 = vmax.f32 %v2025, %v2026
        %v2028 = vsel %vm1908, %v1884, -inf
        %v2029 = vrot.slane %v2028, 4
        %v2030 = vmax.f32 %v2028, %v2029
        %v2031 = vrot.slane %v2030, 2
        %v2032 = vmax.f32 %v2030, %v2031
        %v2033 = vrot.slane %v2032, 1
        %v2034 = vmax.f32 %v2032, %v2033
        %v2035 = vsel %vm1908, %v369, -inf
        %v2036 = vrot.slane %v2035, 4
        %v2037 = vmax.f32 %v2035, %v2036
        %v2038 = vrot.slane %v2037, 2
        %v2039 = vmax.f32 %v2037, %v2038
        %v2040 = vrot.slane %v2039, 1
        %v2041 = vmax.f32 %v2039, %v2040
        %v2042 = vsel %vm1908, %v1885, -inf
        %v2043 = vrot.slane %v2042, 4
        %v2044 = vmax.f32 %v2042, %v2043
        %v2045 = vrot.slane %v2044, 2
        %v2046 = vmax.f32 %v2044, %v2045
        %v2047 = vrot.slane %v2046, 1
        %v2048 = vmax.f32 %v2046, %v2047
        %v2049 = vsel %vm1908, %v370, -inf
        %v2050 = vrot.slane %v2049, 4
        %v2051 = vmax.f32 %v2049, %v2050
        %v2052 = vrot.slane %v2051, 2
        %v2053 = vmax.f32 %v2051, %v2052
        %v2054 = vrot.slane %v2053, 1
        %v2055 = vmax.f32 %v2053, %v2054
        %v2056 = vsel %vm1908, %v1886, -inf
        %v2057 = vrot.slane %v2056, 4
        %v2058 = vmax.f32 %v2056, %v2057
        %v2059 = vrot.slane %v2058, 2
        %v2060 = vmax.f32 %v2058, %v2059
        %v2061 = vrot.slane %v2060, 1
        %v2062 = vmax.f32 %v2060, %v2061
        %v2063 = vsel %vm1908, %v371, -inf
        %v2064 = vrot.slane %v2063, 4
        %v2065 = vmax.f32 %v2063, %v2064
        %v2066 = vrot.slane %v2065, 2
        %v2067 = vmax.f32 %v2065, %v2066
        %v2068 = vrot.slane %v2067, 1
        %v2069 = vmax.f32 %v2067, %v2068
        %v2070 = vsel %vm1908, %v1887, -inf
        %v2071 = vrot.slane %v2070, 4
        %v2072 = vmax.f32 %v2070, %v2071
        %v2073 = vrot.slane %v2072, 2
        %v2074 = vmax.f32 %v2072, %v2073
        %v2075 = vrot.slane %v2074, 1
        %v2076 = vmax.f32 %v2074, %v2075
        %v2077 = vsel %vm1908, %v372, -inf
        %v2078 = vrot.slane %v2077, 4
        %v2079 = vmax.f32 %v2077, %v2078
        %v2080 = vrot.slane %v2079, 2
        %v2081 = vmax.f32 %v2079, %v2080
        %v2082 = vrot.slane %v2081, 1
        %v2083 = vmax.f32 %v2081, %v2082
        %v2084 = vsel %vm1908, %v1888, -inf
        %v2085 = vrot.slane %v2084, 4
        %v2086 = vmax.f32 %v2084, %v2085
        %v2087 = vrot.slane %v2086, 2
        %v2088 = vmax.f32 %v2086, %v2087
        %v2089 = vrot.slane %v2088, 1
        %v2090 = vmax.f32 %v2088, %v2089
        %v2091 = vsel %vm1908, %v373, -inf
        %v2092 = vrot.slane %v2091, 4
        %v2093 = vmax.f32 %v2091, %v2092
        %v2094 = vrot.slane %v2093, 2
        %v2095 = vmax.f32 %v2093, %v2094
        %v2096 = vrot.slane %v2095, 1
        %v2097 = vmax.f32 %v2095, %v2096
        %v2098 = vsel %vm1908, %v1889, -inf
        %v2099 = vrot.slane %v2098, 4
        %v2100 = vmax.f32 %v2098, %v2099
        %v2101 = vrot.slane %v2100, 2
        %v2102 = vmax.f32 %v2100, %v2101
        %v2103 = vrot.slane %v2102, 1
        %v2104 = vmax.f32 %v2102, %v2103
        %v2105 = vsel %vm1908, %v374, -inf
        %v2106 = vrot.slane %v2105, 4
        %v2107 = vmax.f32 %v2105, %v2106
        %v2108 = vrot.slane %v2107, 2
        %v2109 = vmax.f32 %v2107, %v2108
        %v2110 = vrot.slane %v2109, 1
        %v2111 = vmax.f32 %v2109, %v2110
        %v2112 = vsel %vm1908, %v1890, -inf
        %v2113 = vrot.slane %v2112, 4
        %v2114 = vmax.f32 %v2112, %v2113
        %v2115 = vrot.slane %v2114, 2
        %v2116 = vmax.f32 %v2114, %v2115
        %v2117 = vrot.slane %v2116, 1
        %v2118 = vmax.f32 %v2116, %v2117
        %v2119 = vsel %vm1908, %v375, -inf
        %v2120 = vrot.slane %v2119, 4
        %v2121 = vmax.f32 %v2119, %v2120
        %v2122 = vrot.slane %v2121, 2
        %v2123 = vmax.f32 %v2121, %v2122
        %v2124 = vrot.slane %v2123, 1
        %v2125 = vmax.f32 %v2123, %v2124
        %v2126 = vsel %vm1908, %v1891, -inf
        %v2127 = vrot.slane %v2126, 4
        %v2128 = vmax.f32 %v2126, %v2127
        %v2129 = vrot.slane %v2128, 2
        %v2130 = vmax.f32 %v2128, %v2129
        %v2131 = vrot.slane %v2130, 1
        %v2132 = vmax.f32 %v2130, %v2131
        %2134 = vset.pattern.permute.xlu0 0
        %2135 = vperm.xlu0 %2134, %v1915
        %v2136 = vpop.permute.xlu0 %2135
        %2139 = vset.pattern.permute.xlu0 0
        %2140 = vperm.xlu0 %2139, %v1922
        %v2141 = vpop.permute.xlu0 %2140
        %2144 = vset.pattern.permute.xlu0 0
        %2145 = vperm.xlu0 %2144, %v1929
        %v2146 = vpop.permute.xlu0 %2145
        %2149 = vset.pattern.permute.xlu0 0
        %2150 = vperm.xlu0 %2149, %v1936
        %v2151 = vpop.permute.xlu0 %2150
        %2154 = vset.pattern.permute.xlu0 0
        %2155 = vperm.xlu0 %2154, %v1943
        %v2156 = vpop.permute.xlu0 %2155
        %2159 = vset.pattern.permute.xlu0 0
        %2160 = vperm.xlu0 %2159, %v1950
        %v2161 = vpop.permute.xlu0 %2160
        %2164 = vset.pattern.permute.xlu0 0
        %2165 = vperm.xlu0 %2164, %v1957
        %v2166 = vpop.permute.xlu0 %2165
        %2169 = vset.pattern.permute.xlu0 0
        %2170 = vperm.xlu0 %2169, %v1964
        %v2171 = vpop.permute.xlu0 %2170
        %2174 = vset.pattern.permute.xlu0 0
        %2175 = vperm.xlu0 %2174, %v1971
        %v2176 = vpop.permute.xlu0 %2175
        %2179 = vset.pattern.permute.xlu0 0
        %2180 = vperm.xlu0 %2179, %v1978
        %v2181 = vpop.permute.xlu0 %2180
        %2184 = vset.pattern.permute.xlu0 0
        %2185 = vperm.xlu0 %2184, %v1985
        %v2186 = vpop.permute.xlu0 %2185
        %2189 = vset.pattern.permute.xlu0 0
        %2190 = vperm.xlu0 %2189, %v1992
        %v2191 = vpop.permute.xlu0 %2190
        %2194 = vset.pattern.permute.xlu0 0
        %2195 = vperm.xlu0 %2194, %v1999
        %v2196 = vpop.permute.xlu0 %2195
        %2199 = vset.pattern.permute.xlu0 0
        %2200 = vperm.xlu0 %2199, %v2006
        %v2201 = vpop.permute.xlu0 %2200
        %2204 = vset.pattern.permute.xlu0 0
        %2205 = vperm.xlu0 %2204, %v2013
        %v2206 = vpop.permute.xlu0 %2205
        %2209 = vset.pattern.permute.xlu0 0
        %2210 = vperm.xlu0 %2209, %v2020
        %v2211 = vpop.permute.xlu0 %2210
        %2214 = vset.pattern.permute.xlu0 0
        %2215 = vperm.xlu0 %2214, %v2027
        %v2216 = vpop.permute.xlu0 %2215
        %2219 = vset.pattern.permute.xlu0 0
        %2220 = vperm.xlu0 %2219, %v2034
        %v2221 = vpop.permute.xlu0 %2220
        %2224 = vset.pattern.permute.xlu0 0
        %2225 = vperm.xlu0 %2224, %v2041
        %v2226 = vpop.permute.xlu0 %2225
        %2229 = vset.pattern.permute.xlu0 0
        %2230 = vperm.xlu0 %2229, %v2048
        %v2231 = vpop.permute.xlu0 %2230
        %2234 = vset.pattern.permute.xlu0 0
        %2235 = vperm.xlu0 %2234, %v2055
        %v2236 = vpop.permute.xlu0 %2235
        %2239 = vset.pattern.permute.xlu0 0
        %2240 = vperm.xlu0 %2239, %v2062
        %v2241 = vpop.permute.xlu0 %2240
        %2244 = vset.pattern.permute.xlu0 0
        %2245 = vperm.xlu0 %2244, %v2069
        %v2246 = vpop.permute.xlu0 %2245
        %2249 = vset.pattern.permute.xlu0 0
        %2250 = vperm.xlu0 %2249, %v2076
        %v2251 = vpop.permute.xlu0 %2250
        %2254 = vset.pattern.permute.xlu0 0
        %2255 = vperm.xlu0 %2254, %v2083
        %v2256 = vpop.permute.xlu0 %2255
        %2259 = vset.pattern.permute.xlu0 0
        %2260 = vperm.xlu0 %2259, %v2090
        %v2261 = vpop.permute.xlu0 %2260
        %2264 = vset.pattern.permute.xlu0 0
        %2265 = vperm.xlu0 %2264, %v2097
        %v2266 = vpop.permute.xlu0 %2265
        %2269 = vset.pattern.permute.xlu0 0
        %2270 = vperm.xlu0 %2269, %v2104
        %v2271 = vpop.permute.xlu0 %2270
        %2274 = vset.pattern.permute.xlu0 0
        %2275 = vperm.xlu0 %2274, %v2111
        %v2276 = vpop.permute.xlu0 %2275
        %2279 = vset.pattern.permute.xlu0 0
        %2280 = vperm.xlu0 %2279, %v2118
        %v2281 = vpop.permute.xlu0 %2280
        %2284 = vset.pattern.permute.xlu0 0
        %2285 = vperm.xlu0 %2284, %v2125
        %v2286 = vpop.permute.xlu0 %2285
        %2289 = vset.pattern.permute.xlu0 0
        %2290 = vperm.xlu0 %2289, %v2132
        %v2291 = vpop.permute.xlu0 %2290
        %v2293 = vmul.f32 %v1658, %v2136
        %v2294 = vmul.f32 %v1665, %v2141
        %v2295 = vmul.f32 %v1672, %v2146
        %v2296 = vmul.f32 %v1679, %v2151
        %v2297 = vmul.f32 %v1686, %v2156
        %v2298 = vmul.f32 %v1693, %v2161
        %v2299 = vmul.f32 %v1700, %v2166
        %v2300 = vmul.f32 %v1707, %v2171
        %v2301 = vmul.f32 %v1714, %v2176
        %v2302 = vmul.f32 %v1721, %v2181
        %v2303 = vmul.f32 %v1728, %v2186
        %v2304 = vmul.f32 %v1735, %v2191
        %v2305 = vmul.f32 %v1742, %v2196
        %v2306 = vmul.f32 %v1749, %v2201
        %v2307 = vmul.f32 %v1756, %v2206
        %v2308 = vmul.f32 %v1763, %v2211
        %v2309 = vmul.f32 %v1770, %v2216
        %v2310 = vmul.f32 %v1777, %v2221
        %v2311 = vmul.f32 %v1784, %v2226
        %v2312 = vmul.f32 %v1791, %v2231
        %v2313 = vmul.f32 %v1798, %v2236
        %v2314 = vmul.f32 %v1805, %v2241
        %v2315 = vmul.f32 %v1812, %v2246
        %v2316 = vmul.f32 %v1819, %v2251
        %v2317 = vmul.f32 %v1826, %v2256
        %v2318 = vmul.f32 %v1833, %v2261
        %v2319 = vmul.f32 %v1840, %v2266
        %v2320 = vmul.f32 %v1847, %v2271
        %v2321 = vmul.f32 %v1854, %v2276
        %v2322 = vmul.f32 %v1861, %v2281
        %v2323 = vmul.f32 %v1868, %v2286
        %v2324 = vmul.f32 %v1875, %v2291
        %vm2357 = vcmask 1041409
        %v2358 = vsel %vm2357, %v2294, %v2293
        %vm2359 = vcmask 1042434
        %v2360 = vsel %vm2359, %v2295, %v2358
        %vm2361 = vcmask 1043459
        %v2362 = vsel %vm2361, %v2296, %v2360
        %vm2363 = vcmask 1044484
        %v2364 = vsel %vm2363, %v2297, %v2362
        %vm2365 = vcmask 1045509
        %v2366 = vsel %vm2365, %v2298, %v2364
        %vm2367 = vcmask 1046534
        %v2368 = vsel %vm2367, %v2299, %v2366
        %vm2369 = vcmask 1047559
        %v2370 = vsel %vm2369, %v2300, %v2368
        %v2371 = vsel %vm2357, %v2302, %v2301
        %v2372 = vsel %vm2359, %v2303, %v2371
        %v2373 = vsel %vm2361, %v2304, %v2372
        %v2374 = vsel %vm2363, %v2305, %v2373
        %v2375 = vsel %vm2365, %v2306, %v2374
        %v2376 = vsel %vm2367, %v2307, %v2375
        %v2377 = vsel %vm2369, %v2308, %v2376
        %v2378 = vsel %vm2357, %v2310, %v2309
        %v2379 = vsel %vm2359, %v2311, %v2378
        %v2380 = vsel %vm2361, %v2312, %v2379
        %v2381 = vsel %vm2363, %v2313, %v2380
        %v2382 = vsel %vm2365, %v2314, %v2381
        %v2383 = vsel %vm2367, %v2315, %v2382
        %v2384 = vsel %vm2369, %v2316, %v2383
        %v2385 = vsel %vm2357, %v2318, %v2317
        %v2386 = vsel %vm2359, %v2319, %v2385
        %v2387 = vsel %vm2361, %v2320, %v2386
        %v2388 = vsel %vm2363, %v2321, %v2387
        %v2389 = vsel %vm2365, %v2322, %v2388
        %v2390 = vsel %vm2367, %v2323, %v2389
        %v2391 = vsel %vm2369, %v2324, %v2390
        %2396 = vst.msk [vmem:[%s316] sm:$0xff] %vm1161, %v2370
        %2397 = vst.msk [vmem:[%s316 + $0x8] sm:$0xff] %vm1161, %v2377
        %2398 = vst.msk [vmem:[%s316 + $0x10] sm:$0xff] %vm1161, %v2384
        %2399 = vst.msk [vmem:[%s316 + $0x18] sm:$0xff] %vm1161, %v2391
        %v2400 = vsel %vm2357, %v1922, %v1915
        %v2401 = vsel %vm2359, %v1929, %v2400
        %v2402 = vsel %vm2361, %v1936, %v2401
        %v2403 = vsel %vm2363, %v1943, %v2402
        %v2404 = vsel %vm2365, %v1950, %v2403
        %v2405 = vsel %vm2367, %v1957, %v2404
        %v2406 = vsel %vm2369, %v1964, %v2405
        %v2407 = vsel %vm2357, %v1978, %v1971
        %v2408 = vsel %vm2359, %v1985, %v2407
        %v2409 = vsel %vm2361, %v1992, %v2408
        %v2410 = vsel %vm2363, %v1999, %v2409
        %v2411 = vsel %vm2365, %v2006, %v2410
        %v2412 = vsel %vm2367, %v2013, %v2411
        %v2413 = vsel %vm2369, %v2020, %v2412
        %v2414 = vsel %vm2357, %v2034, %v2027
        %v2415 = vsel %vm2359, %v2041, %v2414
        %v2416 = vsel %vm2361, %v2048, %v2415
        %v2417 = vsel %vm2363, %v2055, %v2416
        %v2418 = vsel %vm2365, %v2062, %v2417
        %v2419 = vsel %vm2367, %v2069, %v2418
        %v2420 = vsel %vm2369, %v2076, %v2419
        %v2421 = vsel %vm2357, %v2090, %v2083
        %v2422 = vsel %vm2359, %v2097, %v2421
        %v2423 = vsel %vm2361, %v2104, %v2422
        %v2424 = vsel %vm2363, %v2111, %v2423
        %v2425 = vsel %vm2365, %v2118, %v2424
        %v2426 = vsel %vm2367, %v2125, %v2425
        %v2427 = vsel %vm2369, %v2132, %v2426
        %vm2432 = vcmask 7168
        %2433 = vst.msk [vmem:[%s341] sm:$0xff] %vm2432, %v2406
        %2434 = vst.msk [vmem:[%s341 + $0x8] sm:$0xff] %vm2432, %v2413
        %2435 = vst.msk [vmem:[%s341 + $0x10] sm:$0xff] %vm2432, %v2420
        %2436 = vst.msk [vmem:[%s341 + $0x18] sm:$0xff] %vm2432, %v2427
        %s2437 = sand.u32 %s188, 1
        %s2438 = scalar_lea.sflag [#allocation3], %s2437
        %s2439 = sand.u32 %s188, 1
        %s2440 = smul.addr %s2439, 32
        %s2441 = scalar_lea.vmem [#allocation2], %s2440
        %s2442 = smul.u32 4, %s23
        %p2443 = scmp.lt.s32.totalorder %s2442, 7
        %s2444 = scalar_select %p2443, %s2442, 7
        %s2445 = smul.addr %s2444, 8
        %s2446 = scalar_lea.vmem %s8, %s2445
        // Predicated region
        $region49: #{tpu_custom_call.1} parent=47 // pred_check
          %p2447 = pneg %p198
        $region50: #{tpu_custom_call.1} parent=47 // pred_check_branch
          %2449 = sbr.rel (%p2447) target = $region52
        $region51: #{tpu_custom_call.1} parent=47 // pred_region
          %s2450 = smul.u32 4, %s23
          %s2452 = ssub.s32 512, 512
          %2453 = vsyncadd %s2438, %s2452
          %s2454 = smul.addr %s2450, 128
          %s2455 = scalar_lea.hbm %s7, %s2454
          %s2456 = sshll.u32 %s2441, 4
          %s2457 = int_to_ptr.vmem [resolvable:$true] %s2456
          %2462 = dma.vmem_to_hbm [thread:$0]  %s2457, 512, %s2455, %s2438, 128, 128, 8
        $region52: #{tpu_custom_call.1} parent=47 // pred_fallthru
          _
        // Predicated region
        $region53: #{tpu_custom_call.1} parent=47 // pred_check
          %p2463 = pneg %p224
        $region54: #{tpu_custom_call.1} parent=47 // pred_check_branch
          %2465 = sbr.rel (%p2463) target = $region56
        $region55: #{tpu_custom_call.1} parent=47 // pred_region
          %s2466 = smul.u32 4, %s23
        $region56: #{tpu_custom_call.1} parent=47 // pred_fallthru
          _
      $region48: #{tpu_custom_call.1} parent=5 // pred_fallthru
        _
      %p2467 = scmp.le.s32.totalorder 2, %s18
      // Predicated region
      $region57: #{tpu_custom_call.1} parent=5 // pred_check
        %p2468 = pneg %p2467
      $region58: #{tpu_custom_call.1} parent=5 // pred_check_branch
        %2470 = sbr.rel (%p2468) target = $region60
      $region59: #{tpu_custom_call.1} parent=5 // pred_region
        %s2471 = ssub.s32 %s18, 2
        // Predicated region
        $region61: #{tpu_custom_call.1} parent=59 // pred_check
          %p2472 = pneg %p204
        $region62: #{tpu_custom_call.1} parent=59 // pred_check_branch
          %2474 = sbr.rel (%p2472) target = $region64
        $region63: #{tpu_custom_call.1} parent=59 // pred_region
          %s2475 = sand.u32 %s189, 1
          %s2476 = scalar_lea.sflag [#allocation3], %s2475
          %s2477 = sand.u32 %s189, 1
          %s2478 = smul.addr %s2477, 32
          %s2479 = scalar_lea.vmem [#allocation2], %s2478
          %2480 = dma.done %s2476, 512
        $region64: #{tpu_custom_call.1} parent=59 // pred_fallthru
          _
        // Predicated region
        $region65: #{tpu_custom_call.1} parent=59 // pred_check
          %p2481 = pneg %p230
        $region66: #{tpu_custom_call.1} parent=59 // pred_check_branch
          %2483 = sbr.rel (%p2481) target = $region68
        $region67: #{tpu_custom_call.1} parent=59 // pred_region
          %s2484 = smul.u32 4, %s24
          %p2485 = scmp.lt.s32.totalorder %s2484, 7
          %s2486 = scalar_select %p2485, %s2484, 7
          %s2487 = smul.addr %s2486, 8
          %s2488 = scalar_lea.vmem %s8, %s2487
        $region68: #{tpu_custom_call.1} parent=59 // pred_fallthru
          _
      $region60: #{tpu_custom_call.1} parent=5 // pred_fallthru
        _
    $region6: #{tpu_custom_call.1} parent=1 // loop_footer
      %s22 = sadd.s32 1, %s18
    $region7: #{tpu_custom_call.1} parent=1 // loop_footer_branch
      %17 = sbr.rel target = $region3
    $region8: #{tpu_custom_call.1} parent=1 // loop_exit
      _
    %2489 = vsyncpa [#allocation3], 1
    %s2490 = scalar_lea.sflag [#allocation3], 1
    %2491 = vsyncpa %s2490, 1

</llo_original>
